<compile_context>
chip_gen: v6e
topology: v6e:2x2x1
jax: 0.10.0
libtpu: 0.0.40
codegen_flags: <defaults>
</compile_context>

<pallas_src>
import jax
import jax.numpy as jnp
from jax.experimental import pallas as pl
from jax.experimental.pallas import tpu as pltpu

KH = KW = 4
STRIDE = 2
PAD = 1
EPS = 1e-5
LEAK = 0.2
LANE = 128  # base channel tile (lane width); raised to 256 when it fits


def _vmem_capacity_bytes():
    try:
        return int(pltpu.get_tpu_info().vmem_capacity_bytes)
    except Exception:
        return 64 * 1024 * 1024  # conservative default (v7x per-core VMEM)


def _pick_row_tile(h_out, w_out, target_rows=2048):
    """Largest divisor of h_out with th*w_out <= target, preferring tiles whose
    matmul row count is a multiple of the 8-sublane pack."""
    best, best_aligned = 1, None
    for th in range(1, h_out + 1):
        if h_out % th == 0 and th * w_out <= target_rows:
            best = th
            if (th * w_out) % 8 == 0:
                best_aligned = th
    return best_aligned if best_aligned is not None else best


def _pick_tap_group(c_in, max_k=2048):
    """Number of conv taps fused per MXU dot: biggest group with K = g*c_in <= max_k."""
    for g in (16, 8, 4, 2, 1):
        if g * c_in <= max_k:
            return g
    return 1


def _pick_channel_tile(c_out_pad, p, vmem_cap):
    """256-wide channel tiles fill the v6e/v7x MXU and halve input re-streaming,
    but only when the (double-buffered) resident f32 output block leaves headroom."""
    if c_out_pad % 256 == 0 and 2 * p * 256 * 4 <= vmem_cap // 3:
        return 256
    return 128


def _make_kernel(th, w_out, c_in, tc, h_out, group, normalize):
    tpr = th * w_out                 # matmul rows per grid step
    n_ht = h_out // th
    p_total = h_out * w_out
    inv_p = 1.0 / float(p_total)
    n_groups = (KH * KW) // group

    def kernel(xa_ref, xb_ref, w_ref, o_ref, sum_ref, ssq_ref):
        # xa_ref: (1, 2, th, 2*(w_out+1), c_in) bf16  body rows j*th .. j*th+th-1 (both row parities)
        # xb_ref: (1, 2, 1,  2*(w_out+1), c_in) bf16  halo row  j*th+th
        # w_ref : (KH*KW*c_in, tc)              bf16  tap-major im2col weights
        # o_ref : (1, p_total, tc)              f32   VMEM-resident across j
        # sum_ref, ssq_ref : (1, tc)            f32   streaming instance-norm stats
        j = pl.program_id(2)

        if normalize:
            @pl.when(j == 0)
            def _init():
                sum_ref[...] = jnp.zeros_like(sum_ref)
                ssq_ref[...] = jnp.zeros_like(ssq_ref)

        a0 = xa_ref[0, 0]            # (th, 2*(w_out+1), c_in)  row parity 0
        a1 = xa_ref[0, 1]            # (th, 2*(w_out+1), c_in)  row parity 1
        b0 = xb_ref[0, 0]            # (1,  2*(w_out+1), c_in)  halo, parity 0
        b1 = xb_ref[0, 1]            # (1,  2*(w_out+1), c_in)  halo, parity 1

        # Row slab per kernel-height tap kh: rows (kh>>1)..(kh>>1)+th-1 of the
        # (th+1)-row window in row parity (kh & 1).  Concats are along the leading
        # (tile) axis only -> cheap placement, no lane/sublane shuffles.
        if th > 1:
            slabs = [a0, a1,
                     jnp.concatenate([a0[1:], b0], axis=0),
                     jnp.concatenate([a1[1:], b1], axis=0)]
        else:
            slabs = [a0, a1, b0, b1]

        def tap(k):
            kh, kw = divmod(k, KW)
            c0 = (kw & 1) * (w_out + 1) + (kw >> 1)   # column parity block + offset
            return slabs[kh][:, c0:c0 + w_out, :].reshape(tpr, c_in)

        # Conv tile: taps concatenated along the contraction dim -> one (or a few)
        # wide-K MXU dots instead of 16 narrow-K accumulating dots.
        partials = []
        for gi in range(n_groups):
            taps = [tap(k) for k in range(gi * group, (gi + 1) * group)]
            lhs = taps[0] if group == 1 else jnp.concatenate(taps, axis=-1)
            if n_groups == 1:
                wk = w_ref[...]
            else:
                wk = w_ref[gi * group * c_in:(gi + 1) * group * c_in, :]
            partials.append(jnp.dot(lhs, wk, preferred_element_type=jnp.float32))
        acc = partials[0]
        for extra in partials[1:]:
            acc = acc + extra

        start = pl.multiple_of(j * tpr, tpr)
        if normalize:
            # Raw conv output into the resident block; streaming per-channel stats.
            o_ref[0, pl.ds(start, tpr), :] = acc
            sum_ref[...] += jnp.sum(acc, axis=0, keepdims=True)
            ssq_ref[...] += jnp.sum(acc * acc, axis=0, keepdims=True)

            @pl.when(j == pl.num_programs(2) - 1)
            def _finalize():
                mean = sum_ref[...] * inv_p
                var = ssq_ref[...] * inv_p - mean * mean      # biased var (PyTorch IN)
                inv_std = jax.lax.rsqrt(var + EPS)
                scale = inv_std                               # (1, tc)
                shift = -mean * inv_std                       # (1, tc)

                def body(c, carry):
                    s = pl.multiple_of(c * tpr, tpr)
                    y = o_ref[0, pl.ds(s, tpr), :]
                    yn = y * scale + shift
                    o_ref[0, pl.ds(s, tpr), :] = jnp.where(yn >= 0, yn, LEAK * yn)
                    return carry

                jax.lax.fori_loop(0, n_ht, body, 0)
        else:
            o_ref[0, pl.ds(start, tpr), :] = jnp.where(acc >= 0, acc, LEAK * acc)

    return kernel


def unet_down_nhwc(x_nhwc, weight, normalize=True, row_tile=None):
    """x_nhwc: (N, H, W, C_in); weight: (C_out, C_in, 4, 4) PyTorch OIHW layout.
    Returns (N, H/2, W/2, C_out) float32.  Prefer this entry point when chaining
    blocks so no NCHW<->NHWC transposes are needed between layers."""
    # TODO(synk): dropout is identity in eval (module default dropout=0.0); not implemented.
    n, h, w, c_in = x_nhwc.shape
    c_out = weight.shape[0]
    assert weight.shape == (c_out, c_in, KH, KW)
    assert h % 2 == 0 and w % 2 == 0, "k=4, s=2, p=1 down-block expects even H, W"
    h_out, w_out = h // 2, w // 2
    p = h_out * w_out

    th = row_tile if row_tile is not None else _pick_row_tile(h_out, w_out)
    assert h_out % th == 0, "row_tile must divide H_out"
    n_ht = h_out // th

    vmem_cap = _vmem_capacity_bytes()
    vmem_limit = max(32 * 1024 * 1024, min((vmem_cap * 3) // 4, 100 * 1024 * 1024))

    c_out_pad = ((c_out + LANE - 1) // LANE) * LANE
    tc = _pick_channel_tile(c_out_pad, p, vmem_cap)
    n_co = c_out_pad // tc
    group = _pick_tap_group(c_in)

    # ---- activation prep: pad, cast bf16, row/col parity split (single transpose) ----
    xp = jnp.pad(x_nhwc, ((0, 0), (PAD, PAD), (PAD, PAD), (0, 0))).astype(jnp.bfloat16)
    xp = xp.reshape(n, h_out + 1, 2, w_out + 1, 2, c_in)
    xp = jnp.transpose(xp, (0, 2, 1, 4, 3, 5))
    xs = xp.reshape(n, 2, h_out + 1, 2 * (w_out + 1), c_in)

    # ---- weight prep: (C_out, C_in, KH, KW) -> (KH*KW*C_in, C_out_pad), bf16 ----
    w_mat = jnp.transpose(weight, (2, 3, 1, 0)).reshape(KH * KW * c_in, c_out)
    w_mat = jnp.pad(w_mat, ((0, 0), (0, c_out_pad - c_out))).astype(jnp.bfloat16)

    kernel = _make_kernel(th, w_out, c_in, tc, h_out, group, normalize)
    w2 = 2 * (w_out + 1)

    flops = 2 * n * p * (KH * KW * c_in) * c_out_pad
    bytes_accessed = int(n_co * xs.size * 2 + n * w_mat.size * 2 + n * p * c_out_pad * 4)

    y = pl.pallas_call(
        kernel,
        out_shape=jax.ShapeDtypeStruct((n, p, c_out_pad), jnp.float32),
        grid=(n, n_co, n_ht),
        in_specs=[
            # body rows j*th .. j*th+th-1 of the (h_out+1)-row parity-split input
            pl.BlockSpec((1, 2, th, w2, c_in), lambda b, co, j: (b, 0, j, 0, 0)),
            # halo row j*th+th (block size 1 => block index == element offset)
            pl.BlockSpec((1, 2, 1, w2, c_in), lambda b, co, j: (b, 0, (j + 1) * th, 0, 0)),
            # tap-major im2col weights, one channel tile per co
            pl.BlockSpec((KH * KW * c_in, tc), lambda b, co, j: (0, co)),
        ],
        out_specs=pl.BlockSpec((1, p, tc), lambda b, co, j: (b, 0, co)),
        scratch_shapes=[pltpu.VMEM((1, tc), jnp.float32),   # per-channel sum
                        pltpu.VMEM((1, tc), jnp.float32)],  # per-channel sum of squares
        compiler_params=pltpu.CompilerParams(
            dimension_semantics=("parallel", "parallel", "arbitrary"),
            vmem_limit_bytes=vmem_limit),
        cost_estimate=pl.CostEstimate(flops=flops,
                                      transcendentals=n * c_out_pad,
                                      bytes_accessed=bytes_accessed),
    )(xs, xs, w_mat)

    return y[:, :, :c_out].reshape(n, h_out, w_out, c_out)


def unet_down(x_nchw, weight, normalize=True, row_tile=None):
    """PyTorch-compatible NCHW interface around the NHWC-native kernel."""
    x_nhwc = jnp.transpose(x_nchw, (0, 2, 3, 1))
    y = unet_down_nhwc(x_nhwc, weight, normalize=normalize, row_tile=row_tile)
    return jnp.transpose(y, (0, 3, 1, 2))


def _reference(x_nchw, weight, normalize=True):
    # Pure-JAX reference of Conv2d(4,2,1,bias=False) [+ InstanceNorm2d] + LeakyReLU(0.2).
    # Inputs rounded to bf16 to match the kernel's MXU input precision (f32 accumulation).
    xb = x_nchw.astype(jnp.bfloat16).astype(jnp.float32)
    wb = weight.astype(jnp.bfloat16).astype(jnp.float32)
    y = jax.lax.conv_general_dilated(
        xb, wb, window_strides=(STRIDE, STRIDE),
        padding=((PAD, PAD), (PAD, PAD)),
        dimension_numbers=("NCHW", "OIHW", "NCHW"))
    if normalize:
        mean = jnp.mean(y, axis=(2, 3), keepdims=True)
        var = jnp.mean((y - mean) ** 2, axis=(2, 3), keepdims=True)
        y = (y - mean) * jax.lax.rsqrt(var + EPS)
    return jnp.where(y >= 0, y, LEAK * y)


if __name__ == "__main__":
    key = jax.random.PRNGKey(0)
    N, C_IN, H, W = 2, 4, 16, 16
    C_OUT = 8

    kx, kw = jax.random.split(key)
    x = jax.random.normal(kx, (N, C_IN, H, W), dtype=jnp.float32)
    # Deterministic synthetic weights for Conv2d(in_size, out_size, 4, 2, 1, bias=False)
    weight = jax.random.normal(kw, (C_OUT, C_IN, KH, KW), dtype=jnp.float32) * 0.1

    # normalize=True, row_tile=4 -> two streamed row tiles per image, exercising the
    # accumulated-stats path and the chunked finalize loop.
    out = jax.block_until_ready(unet_down(x, weight, row_tile=4))
    ref = _reference(x, weight)
    assert out.shape == (N, C_OUT, H // 2, W // 2), out.shape
    err = float(jnp.max(jnp.abs(out - ref)))
    assert jnp.allclose(out, ref, atol=2e-3, rtol=2e-3), err

    # normalize=False (conv + LeakyReLU only), default single row tile.
    out2 = jax.block_until_ready(unet_down(x, weight, normalize=False))
    ref2 = _reference(x, weight, normalize=False)
    err2 = float(jnp.max(jnp.abs(out2 - ref2)))
    assert jnp.allclose(out2, ref2, atol=2e-3, rtol=2e-3), err2

    print("KERNEL_OK")
</pallas_src>

<mosaic_0001>
module attributes {stable_mosaic.version = 11 : i64} {
  func.func @kernel(%arg0: i32, %arg1: i32, %arg2: i32, %arg3: memref<1x2x4x18x4xbf16, #tpu.memory_space<vmem>>, %arg4: memref<1x2x1x18x4xbf16, #tpu.memory_space<vmem>>, %arg5: memref<64x128xbf16, #tpu.memory_space<vmem>>, %arg6: memref<1x64x128xf32, #tpu.memory_space<vmem>>, %arg7: memref<1x128xf32, #tpu.memory_space<vmem>>, %arg8: memref<1x128xf32, #tpu.memory_space<vmem>>) attributes {dimension_semantics = [#tpu.dimension_semantics<parallel>, #tpu.dimension_semantics<parallel>, #tpu.dimension_semantics<arbitrary>], iteration_bounds = array<i64: 2, 1, 2>, scalar_prefetch = 0 : i64, scratch_operands = 2 : i64, tpu.core_type = #tpu.core_type<tc>, window_params = [{transform_indices = @transform_0, window_bounds = array<i64: 1, 2, 4, 18, 4>}, {transform_indices = @transform_1, window_bounds = array<i64: 1, 2, 1, 18, 4>}, {transform_indices = @transform_2, window_bounds = array<i64: 64, 128>}, {transform_indices = @transform_3, window_bounds = array<i64: 1, 64, 128>}]} {
    %c0_i32 = arith.constant 0 : i32
    %0 = arith.cmpi eq, %arg2, %c0_i32 : i32
    %1 = arith.extui %0 : i1 to i32
    %c0_i32_0 = arith.constant 0 : i32
    %2 = arith.cmpi ne, %1, %c0_i32_0 : i32
    scf.if %2 {
      %cst_34 = arith.constant 0.000000e+00 : f32
      %70 = vector.broadcast %cst_34 : f32 to vector<1x128xf32>
      %c0_35 = arith.constant 0 : index
      %c0_36 = arith.constant 0 : index
      %71 = vector.load %arg7[%c0_35, %c0_36] : memref<1x128xf32, #tpu.memory_space<vmem>>, vector<1x128xf32>
      tpu.vector_store %arg7[%c0_35, %c0_36], %70 {strides = array<i32>} : memref<1x128xf32, #tpu.memory_space<vmem>>, vector<1x128xf32>,
      %cst_37 = arith.constant 0.000000e+00 : f32
      %72 = vector.broadcast %cst_37 : f32 to vector<1x128xf32>
      %c0_38 = arith.constant 0 : index
      %c0_39 = arith.constant 0 : index
      %73 = vector.load %arg8[%c0_38, %c0_39] : memref<1x128xf32, #tpu.memory_space<vmem>>, vector<1x128xf32>
      tpu.vector_store %arg8[%c0_38, %c0_39], %72 {strides = array<i32>} : memref<1x128xf32, #tpu.memory_space<vmem>>, vector<1x128xf32>,
    } else {
    }
    %c0 = arith.constant 0 : index
    %c0_1 = arith.constant 0 : index
    %c0_2 = arith.constant 0 : index
    %c0_3 = arith.constant 0 : index
    %c0_4 = arith.constant 0 : index
    %3 = vector.load %arg3[%c0, %c0_1, %c0_2, %c0_3, %c0_4] : memref<1x2x4x18x4xbf16, #tpu.memory_space<vmem>>, vector<1x1x4x18x4xbf16>
    %4 = vector.shape_cast %3 : vector<1x1x4x18x4xbf16> to vector<4x18x4xbf16>
    %c0_5 = arith.constant 0 : index
    %c1 = arith.constant 1 : index
    %c0_6 = arith.constant 0 : index
    %c0_7 = arith.constant 0 : index
    %c0_8 = arith.constant 0 : index
    %5 = vector.load %arg3[%c0_5, %c1, %c0_6, %c0_7, %c0_8] : memref<1x2x4x18x4xbf16, #tpu.memory_space<vmem>>, vector<1x1x4x18x4xbf16>
    %6 = vector.shape_cast %5 : vector<1x1x4x18x4xbf16> to vector<4x18x4xbf16>
    %c0_9 = arith.constant 0 : index
    %c0_10 = arith.constant 0 : index
    %c0_11 = arith.constant 0 : index
    %c0_12 = arith.constant 0 : index
    %c0_13 = arith.constant 0 : index
    %7 = vector.load %arg4[%c0_9, %c0_10, %c0_11, %c0_12, %c0_13] : memref<1x2x1x18x4xbf16, #tpu.memory_space<vmem>>, vector<1x1x1x18x4xbf16>
    %8 = vector.shape_cast %7 : vector<1x1x1x18x4xbf16> to vector<1x18x4xbf16>
    %c0_14 = arith.constant 0 : index
    %c1_15 = arith.constant 1 : index
    %c0_16 = arith.constant 0 : index
    %c0_17 = arith.constant 0 : index
    %c0_18 = arith.constant 0 : index
    %9 = vector.load %arg4[%c0_14, %c1_15, %c0_16, %c0_17, %c0_18] : memref<1x2x1x18x4xbf16, #tpu.memory_space<vmem>>, vector<1x1x1x18x4xbf16>
    %10 = vector.shape_cast %9 : vector<1x1x1x18x4xbf16> to vector<1x18x4xbf16>
    %11 = vector.extract_strided_slice %4 {offsets = [1, 0, 0], sizes = [3, 18, 4], strides = [1, 1, 1]} : vector<4x18x4xbf16> to vector<3x18x4xbf16>
    %12 = tpu.concatenate %11, %8 in 0 : vector<3x18x4xbf16>, vector<1x18x4xbf16> -> vector<4x18x4xbf16>
    %13 = vector.extract_strided_slice %6 {offsets = [1, 0, 0], sizes = [3, 18, 4], strides = [1, 1, 1]} : vector<4x18x4xbf16> to vector<3x18x4xbf16>
    %14 = tpu.concatenate %13, %10 in 0 : vector<3x18x4xbf16>, vector<1x18x4xbf16> -> vector<4x18x4xbf16>
    %15 = vector.extract_strided_slice %4 {offsets = [0, 0, 0], sizes = [4, 8, 4], strides = [1, 1, 1]} : vector<4x18x4xbf16> to vector<4x8x4xbf16>
    %16 = vector.shape_cast %15 : vector<4x8x4xbf16> to vector<32x4xbf16>
    %17 = vector.extract_strided_slice %4 {offsets = [0, 9, 0], sizes = [4, 8, 4], strides = [1, 1, 1]} : vector<4x18x4xbf16> to vector<4x8x4xbf16>
    %18 = vector.shape_cast %17 : vector<4x8x4xbf16> to vector<32x4xbf16>
    %19 = vector.extract_strided_slice %4 {offsets = [0, 1, 0], sizes = [4, 8, 4], strides = [1, 1, 1]} : vector<4x18x4xbf16> to vector<4x8x4xbf16>
    %20 = vector.shape_cast %19 : vector<4x8x4xbf16> to vector<32x4xbf16>
    %21 = vector.extract_strided_slice %4 {offsets = [0, 10, 0], sizes = [4, 8, 4], strides = [1, 1, 1]} : vector<4x18x4xbf16> to vector<4x8x4xbf16>
    %22 = vector.shape_cast %21 : vector<4x8x4xbf16> to vector<32x4xbf16>
    %23 = vector.extract_strided_slice %6 {offsets = [0, 0, 0], sizes = [4, 8, 4], strides = [1, 1, 1]} : vector<4x18x4xbf16> to vector<4x8x4xbf16>
    %24 = vector.shape_cast %23 : vector<4x8x4xbf16> to vector<32x4xbf16>
    %25 = vector.extract_strided_slice %6 {offsets = [0, 9, 0], sizes = [4, 8, 4], strides = [1, 1, 1]} : vector<4x18x4xbf16> to vector<4x8x4xbf16>
    %26 = vector.shape_cast %25 : vector<4x8x4xbf16> to vector<32x4xbf16>
    %27 = vector.extract_strided_slice %6 {offsets = [0, 1, 0], sizes = [4, 8, 4], strides = [1, 1, 1]} : vector<4x18x4xbf16> to vector<4x8x4xbf16>
    %28 = vector.shape_cast %27 : vector<4x8x4xbf16> to vector<32x4xbf16>
    %29 = vector.extract_strided_slice %6 {offsets = [0, 10, 0], sizes = [4, 8, 4], strides = [1, 1, 1]} : vector<4x18x4xbf16> to vector<4x8x4xbf16>
    %30 = vector.shape_cast %29 : vector<4x8x4xbf16> to vector<32x4xbf16>
    %31 = vector.extract_strided_slice %12 {offsets = [0, 0, 0], sizes = [4, 8, 4], strides = [1, 1, 1]} : vector<4x18x4xbf16> to vector<4x8x4xbf16>
    %32 = vector.shape_cast %31 : vector<4x8x4xbf16> to vector<32x4xbf16>
    %33 = vector.extract_strided_slice %12 {offsets = [0, 9, 0], sizes = [4, 8, 4], strides = [1, 1, 1]} : vector<4x18x4xbf16> to vector<4x8x4xbf16>
    %34 = vector.shape_cast %33 : vector<4x8x4xbf16> to vector<32x4xbf16>
    %35 = vector.extract_strided_slice %12 {offsets = [0, 1, 0], sizes = [4, 8, 4], strides = [1, 1, 1]} : vector<4x18x4xbf16> to vector<4x8x4xbf16>
    %36 = vector.shape_cast %35 : vector<4x8x4xbf16> to vector<32x4xbf16>
    %37 = vector.extract_strided_slice %12 {offsets = [0, 10, 0], sizes = [4, 8, 4], strides = [1, 1, 1]} : vector<4x18x4xbf16> to vector<4x8x4xbf16>
    %38 = vector.shape_cast %37 : vector<4x8x4xbf16> to vector<32x4xbf16>
    %39 = vector.extract_strided_slice %14 {offsets = [0, 0, 0], sizes = [4, 8, 4], strides = [1, 1, 1]} : vector<4x18x4xbf16> to vector<4x8x4xbf16>
    %40 = vector.shape_cast %39 : vector<4x8x4xbf16> to vector<32x4xbf16>
    %41 = vector.extract_strided_slice %14 {offsets = [0, 9, 0], sizes = [4, 8, 4], strides = [1, 1, 1]} : vector<4x18x4xbf16> to vector<4x8x4xbf16>
    %42 = vector.shape_cast %41 : vector<4x8x4xbf16> to vector<32x4xbf16>
    %43 = vector.extract_strided_slice %14 {offsets = [0, 1, 0], sizes = [4, 8, 4], strides = [1, 1, 1]} : vector<4x18x4xbf16> to vector<4x8x4xbf16>
    %44 = vector.shape_cast %43 : vector<4x8x4xbf16> to vector<32x4xbf16>
    %45 = vector.extract_strided_slice %14 {offsets = [0, 10, 0], sizes = [4, 8, 4], strides = [1, 1, 1]} : vector<4x18x4xbf16> to vector<4x8x4xbf16>
    %46 = vector.shape_cast %45 : vector<4x8x4xbf16> to vector<32x4xbf16>
    %47 = tpu.concatenate %16, %18, %20, %22, %24, %26, %28, %30, %32, %34, %36, %38, %40, %42, %44, %46 in 1 : vector<32x4xbf16>, vector<32x4xbf16>, vector<32x4xbf16>, vector<32x4xbf16>, vector<32x4xbf16>, vector<32x4xbf16>, vector<32x4xbf16>, vector<32x4xbf16>, vector<32x4xbf16>, vector<32x4xbf16>, vector<32x4xbf16>, vector<32x4xbf16>, vector<32x4xbf16>, vector<32x4xbf16>, vector<32x4xbf16>, vector<32x4xbf16> -> vector<32x64xbf16>
    %c0_19 = arith.constant 0 : index
    %c0_20 = arith.constant 0 : index
    %48 = vector.load %arg5[%c0_19, %c0_20] : memref<64x128xbf16, #tpu.memory_space<vmem>>, vector<64x128xbf16>
    %cst = arith.constant dense<0.000000e+00> : vector<32x128xf32>
    %49 = tpu.matmul %47, %48, %cst {dimension_numbers = #tpu.dot_dimension_numbers<[1], [0], [0], [1], [0, 0, 1, 1], [], []>} : vector<32x64xbf16>, vector<64x128xbf16>, vector<32x128xf32> -> vector<32x128xf32>
    %c32_i32 = arith.constant 32 : i32
    %50 = arith.muli %arg2, %c32_i32 : i32
    %51 = tpu.assume_multiple %50, 32 : i32
    %c0_21 = arith.constant 0 : index
    %52 = arith.index_cast %51 : i32 to index
    %c0_22 = arith.constant 0 : index
    %53 = vector.load %arg6[%c0_21, %52, %c0_22] : memref<1x64x128xf32, #tpu.memory_space<vmem>>, vector<1x32x128xf32>
    %54 = vector.shape_cast %53 : vector<1x32x128xf32> to vector<32x128xf32>
    %55 = vector.shape_cast %49 : vector<32x128xf32> to vector<1x32x128xf32>
    tpu.vector_store %arg6[%c0_21, %52, %c0_22], %55 {strides = array<i32>} : memref<1x64x128xf32, #tpu.memory_space<vmem>>, vector<1x32x128xf32>,
    %c0_23 = arith.constant 0 : index
    %c0_24 = arith.constant 0 : index
    %56 = vector.load %arg7[%c0_23, %c0_24] : memref<1x128xf32, #tpu.memory_space<vmem>>, vector<1x128xf32>
    %cst_25 = arith.constant dense<0.000000e+00> : vector<128xf32>
    %57 = vector.multi_reduction <add>, %49, %cst_25 [0] : vector<32x128xf32> to vector<128xf32>
    %58 = vector.shape_cast %57 : vector<128xf32> to vector<1x128xf32>
    %59 = arith.addf %56, %58 : vector<1x128xf32>
    %c0_26 = arith.constant 0 : index
    %c0_27 = arith.constant 0 : index
    %60 = vector.load %arg7[%c0_26, %c0_27] : memref<1x128xf32, #tpu.memory_space<vmem>>, vector<1x128xf32>
    tpu.vector_store %arg7[%c0_26, %c0_27], %59 {strides = array<i32>} : memref<1x128xf32, #tpu.memory_space<vmem>>, vector<1x128xf32>,
    %c0_28 = arith.constant 0 : index
    %c0_29 = arith.constant 0 : index
    %61 = vector.load %arg8[%c0_28, %c0_29] : memref<1x128xf32, #tpu.memory_space<vmem>>, vector<1x128xf32>
    %62 = arith.mulf %49, %49 : vector<32x128xf32>
    %cst_30 = arith.constant dense<0.000000e+00> : vector<128xf32>
    %63 = vector.multi_reduction <add>, %62, %cst_30 [0] : vector<32x128xf32> to vector<128xf32>
    %64 = vector.shape_cast %63 : vector<128xf32> to vector<1x128xf32>
    %65 = arith.addf %61, %64 : vector<1x128xf32>
    %c0_31 = arith.constant 0 : index
    %c0_32 = arith.constant 0 : index
    %66 = vector.load %arg8[%c0_31, %c0_32] : memref<1x128xf32, #tpu.memory_space<vmem>>, vector<1x128xf32>
    tpu.vector_store %arg8[%c0_31, %c0_32], %65 {strides = array<i32>} : memref<1x128xf32, #tpu.memory_space<vmem>>, vector<1x128xf32>,
    %c1_i32 = arith.constant 1 : i32
    %67 = arith.cmpi eq, %arg2, %c1_i32 : i32
    %68 = arith.extui %67 : i1 to i32
    %c0_i32_33 = arith.constant 0 : i32
    %69 = arith.cmpi ne, %68, %c0_i32_33 : i32
    scf.if %69 {
      %c0_34 = arith.constant 0 : index
      %c0_35 = arith.constant 0 : index
      %70 = vector.load %arg7[%c0_34, %c0_35] : memref<1x128xf32, #tpu.memory_space<vmem>>, vector<1x128xf32>
      %cst_36 = arith.constant 1.562500e-02 : f32
      %71 = vector.broadcast %cst_36 : f32 to vector<1x128xf32>
      %72 = arith.mulf %70, %71 : vector<1x128xf32>
      %c0_37 = arith.constant 0 : index
      %c0_38 = arith.constant 0 : index
      %73 = vector.load %arg8[%c0_37, %c0_38] : memref<1x128xf32, #tpu.memory_space<vmem>>, vector<1x128xf32>
      %cst_39 = arith.constant 1.562500e-02 : f32
      %74 = vector.broadcast %cst_39 : f32 to vector<1x128xf32>
      %75 = arith.mulf %73, %74 : vector<1x128xf32>
      %76 = arith.mulf %72, %72 : vector<1x128xf32>
      %77 = arith.subf %75, %76 : vector<1x128xf32>
      %cst_40 = arith.constant 9.99999974E-6 : f32
      %78 = vector.broadcast %cst_40 : f32 to vector<1x128xf32>
      %79 = arith.addf %77, %78 : vector<1x128xf32>
      %80 = math.rsqrt %79 : vector<1x128xf32>
      %cst_41 = arith.constant 0.000000e+00 : f32
      %81 = vector.broadcast %cst_41 : f32 to vector<1x128xf32>
      %82 = arith.subf %81, %72 : vector<1x128xf32>
      %83 = arith.mulf %82, %80 : vector<1x128xf32>
      %c0_i32_42 = arith.constant 0 : i32
      %c2_i32 = arith.constant 2 : i32
      %84 = arith.addi %c0_i32_42, %c2_i32 : i32
      %c1_i32_43 = arith.constant 1 : i32
      scf.for %arg9 = %c0_i32_42 to %84 step %c1_i32_43  : i32 {
        %c32_i32_45 = arith.constant 32 : i32
        %85 = arith.muli %arg9, %c32_i32_45 : i32
        %86 = tpu.assume_multiple %85, 32 : i32
        %c0_46 = arith.constant 0 : index
        %87 = arith.index_cast %86 : i32 to index
        %c0_47 = arith.constant 0 : index
        %88 = vector.load %arg6[%c0_46, %87, %c0_47] : memref<1x64x128xf32, #tpu.memory_space<vmem>>, vector<1x32x128xf32>
        %89 = vector.shape_cast %88 : vector<1x32x128xf32> to vector<32x128xf32>
        %90 = vector.broadcast %80 : vector<1x128xf32> to vector<32x128xf32>
        %91 = arith.mulf %89, %90 : vector<32x128xf32>
        %92 = vector.broadcast %83 : vector<1x128xf32> to vector<32x128xf32>
        %93 = arith.addf %91, %92 : vector<32x128xf32>
        %cst_48 = arith.constant 0.000000e+00 : f32
        %94 = vector.broadcast %cst_48 : f32 to vector<32x128xf32>
        %95 = arith.cmpf oge, %93, %94 : vector<32x128xf32>
        %cst_49 = arith.constant 2.000000e-01 : f32
        %96 = vector.broadcast %cst_49 : f32 to vector<32x128xf32>
        %97 = arith.mulf %96, %93 : vector<32x128xf32>
        %98 = arith.select %95, %93, %97 : vector<32x128xi1>, vector<32x128xf32>
        %c0_50 = arith.constant 0 : index
        %99 = arith.index_cast %86 : i32 to index
        %c0_51 = arith.constant 0 : index
        %100 = vector.load %arg6[%c0_50, %99, %c0_51] : memref<1x64x128xf32, #tpu.memory_space<vmem>>, vector<1x32x128xf32>
        %101 = vector.shape_cast %100 : vector<1x32x128xf32> to vector<32x128xf32>
        %102 = vector.shape_cast %98 : vector<32x128xf32> to vector<1x32x128xf32>
        tpu.vector_store %arg6[%c0_50, %99, %c0_51], %102 {strides = array<i32>} : memref<1x64x128xf32, #tpu.memory_space<vmem>>, vector<1x32x128xf32>,
      }
      %c2_i32_44 = arith.constant 2 : i32
    } else {
    }
    return
  }
  func.func @transform_0(%arg0: i32, %arg1: i32, %arg2: i32) -> (i32, i32, i32, i32, i32) {
    %c0_i32 = arith.constant 0 : i32
    %c0_i32_0 = arith.constant 0 : i32
    %c0_i32_1 = arith.constant 0 : i32
    %c0_i32_2 = arith.constant 0 : i32
    return %arg0, %c0_i32, %arg2, %c0_i32_0, %c0_i32_1 : i32, i32, i32, i32, i32
  }
  func.func @transform_1(%arg0: i32, %arg1: i32, %arg2: i32) -> (i32, i32, i32, i32, i32) {
    %c1_i32 = arith.constant 1 : i32
    %0 = arith.addi %arg2, %c1_i32 : i32
    %c4_i32 = arith.constant 4 : i32
    %1 = arith.muli %0, %c4_i32 : i32
    %c0_i32 = arith.constant 0 : i32
    %c0_i32_0 = arith.constant 0 : i32
    %c0_i32_1 = arith.constant 0 : i32
    %c0_i32_2 = arith.constant 0 : i32
    return %arg0, %c0_i32, %1, %c0_i32_0, %c0_i32_1 : i32, i32, i32, i32, i32
  }
  func.func @transform_2(%arg0: i32, %arg1: i32, %arg2: i32) -> (i32, i32) {
    %c0_i32 = arith.constant 0 : i32
    %c0_i32_0 = arith.constant 0 : i32
    return %c0_i32, %arg1 : i32, i32
  }
  func.func @transform_3(%arg0: i32, %arg1: i32, %arg2: i32) -> (i32, i32, i32) {
    %c0_i32 = arith.constant 0 : i32
    %c0_i32_0 = arith.constant 0 : i32
    return %arg0, %c0_i32, %arg1 : i32, i32, i32
  }
}

</mosaic_0001>

<llo_original>
// kernel: tpu_custom_call.1
$region0: #{tpu_custom_call.1}
  #allocation0 [shape = 'u32[]', space=smem, size = 0x4, offset = 0x4, fixed_abs, tag = 'smem constant byte address 0x4 - core index']
  #allocation1 [shape = 'u32[144,128]{1,0:T(1,128)}', space=vmem, size = 0x12000, scoped, tag = 'internal scratch']
  #allocation2 [shape = 'f32[1,128]{1,0:T(1,128)}', space=vmem, size = 0x200, scoped, tag = 'scratch operand']
  #allocation3 [shape = 'f32[1,128]{1,0:T(1,128)}', space=vmem, size = 0x200, scoped, tag = 'scratch operand']
  %s0 = inlined_call_operand.vmem [shape: bf16[2,2,9,18,4], index: 0, kind: input, shape index: {}]
  %s1 = inlined_call_operand.vmem [shape: bf16[2,2,9,18,4], index: 1, kind: input, shape index: {}]
  %s2 = inlined_call_operand.vmem [shape: bf16[64,128], index: 2, kind: input, shape index: {}]
  %s3 = inlined_call_operand.hbm [shape: f32[2,64,128], index: 3, kind: output, shape index: {}]
  %s4 = sld [smem:[#allocation0]]
  $region163: #{tpu_custom_call.1} parent=0
    _
  %s6 = ssub.s32 1, %s4
  %s7 = scalar_select 0, %s6, %s4
  $region1: #{tpu_custom_call.1} parent=0
    #allocation4 [shape = 'u8[98304]{0}', space=vmem, size = 0x18000, scoped, tag = 'input window, operand 0']
    #allocation5 [shape = 'u8[24576]{0}', space=vmem, size = 0x6000, scoped, tag = 'input window, operand 1']
    #allocation6 [shape = 'u8[65536]{0}', space=vmem, size = 0x10000, scoped, tag = 'output window, operand 0']
    #allocation7 [shape = 's32[2]{0}', space=sflag, size = 0x8, scoped, tag = 'scoped memory for tpu_custom_call.1']
    %8 = vsyncpa [#allocation7], 0
    %s9 = scalar_lea.sflag [#allocation7], 1
    %10 = vsyncpa %s9, 0
    loop: start=0, step=1, limit=6
    $region2: #{tpu_custom_call.1} parent=1 // loop_pre_header
      _
    $region3: #{tpu_custom_call.1} parent=1 // loop_header
      %s12 = sphi 0, %s16
      %p13 = scmp.ge.s32.totalorder %s12, 6
      %s19 = sphi 0, %s38
      %s20 = sphi 0, %s34
      %s21 = sphi 0, %s30
      %s22 = sphi 0, %s19
      %s23 = sphi 0, %s20
      %s24 = sphi 0, %s21
      %s25 = sphi 0, %s22
      %s26 = sphi 0, %s23
      %s27 = sphi 0, %s24
      %s43 = sphi 0, %s45
      %s46 = sphi 0, %s43
      %s47 = sphi 0, %s46
      %s63 = sphi 0, %s47
      %s75 = sphi 0, %s77
      %s78 = sphi 0, %s75
      %s79 = sphi 0, %s78
      %s95 = sphi 0, %s79
      %s101 = sphi 0, %s103
      %s104 = sphi 0, %s101
      %s105 = sphi 0, %s104
      %s121 = sphi 0, %s105
      %s129 = sphi 0, %s131
      %s132 = sphi 0, %s129
      %s133 = sphi 0, %s132
      %s149 = sphi 0, %s133
    $region4: #{tpu_custom_call.1} parent=1 // loop_header_branch
      %15 = sbr.rel (%p13) target = $region8
    $region5: #{tpu_custom_call.1} parent=1 // loop_body
      %s17 = ssub.s32 %s12, 1
      %s18 = ssub.s32 %s12, 2
      %s28 = sadd.s32 1, %s21
      %p29 = scmp.ge.s32.totalorder %s28, 2
      %s30 = scalar_select %p29, 0, %s28
      %s31 = sadd.s32 1, %s20
      %s32 = scalar_select %p29, %s31, %s20
      %p33 = scmp.ge.s32.totalorder %s32, 1
      %s34 = scalar_select %p33, 0, %s32
      %s35 = sadd.s32 1, %s19
      %s36 = scalar_select %p33, %s35, %s19
      %p37 = scmp.ge.s32.totalorder %s36, 2
      %s38 = scalar_select %p37, 0, %s36
      %s39 = ssub.s32 %s19, %s38
      %s40 = ssub.s32 %s21, %s30
      %s41 = sor.u32 %s39, %s40
      %p42 = scmp.eq.s32.totalorder %s41, 0
      %s44 = sadd.s32 %s43, 1
      %s45 = scalar_select %p42, %s43, %s44
      %p48 = pneg %p42
      %p49 = scmp.eq.s32.totalorder %s12, 3
      %p50 = por %p48, %p49
      %p51 = scmp.ne.s32.totalorder %s43, %s46
      %p52 = scmp.eq.s32.totalorder %s12, 0
      %p53 = por %p51, %p52
      %p54 = scmp.ne.s32.totalorder %s43, %s46
      %p55 = scmp.eq.s32.totalorder %s17, 3
      %p56 = por %p54, %p55
      %p57 = scmp.ne.s32.totalorder %s46, %s47
      %p58 = scmp.eq.s32.totalorder %s17, 0
      %p59 = por %p57, %p58
      %p60 = scmp.ne.s32.totalorder %s46, %s47
      %p61 = scmp.eq.s32.totalorder %s18, 3
      %p62 = por %p60, %p61
      %p64 = scmp.ne.s32.totalorder %s47, %s63
      %p65 = scmp.eq.s32.totalorder %s18, 0
      %p66 = por %p64, %p65
      %s67 = sadd.s32 %s21, 1
      %s68 = smul.u32 %s67, 4
      %s69 = sadd.s32 %s30, 1
      %s70 = smul.u32 %s69, 4
      %s71 = ssub.s32 %s19, %s38
      %s72 = ssub.s32 %s68, %s70
      %s73 = sor.u32 %s71, %s72
      %p74 = scmp.eq.s32.totalorder %s73, 0
      %s76 = sadd.s32 %s75, 1
      %s77 = scalar_select %p74, %s75, %s76
      %p80 = pneg %p74
      %p81 = scmp.eq.s32.totalorder %s12, 3
      %p82 = por %p80, %p81
      %p83 = scmp.ne.s32.totalorder %s75, %s78
      %p84 = scmp.eq.s32.totalorder %s12, 0
      %p85 = por %p83, %p84
      %p86 = scmp.ne.s32.totalorder %s75, %s78
      %p87 = scmp.eq.s32.totalorder %s17, 3
      %p88 = por %p86, %p87
      %p89 = scmp.ne.s32.totalorder %s78, %s79
      %p90 = scmp.eq.s32.totalorder %s17, 0
      %p91 = por %p89, %p90
      %p92 = scmp.ne.s32.totalorder %s78, %s79
      %p93 = scmp.eq.s32.totalorder %s18, 3
      %p94 = por %p92, %p93
      %p96 = scmp.ne.s32.totalorder %s79, %s95
      %p97 = scmp.eq.s32.totalorder %s18, 0
      %p98 = por %p96, %p97
      %s99 = ssub.s32 %s20, %s34
      %p100 = scmp.eq.s32.totalorder %s99, 0
      %s102 = sadd.s32 %s101, 1
      %s103 = scalar_select %p100, %s101, %s102
      %p106 = pneg %p100
      %p107 = scmp.eq.s32.totalorder %s12, 3
      %p108 = por %p106, %p107
      %p109 = scmp.ne.s32.totalorder %s101, %s104
      %p110 = scmp.eq.s32.totalorder %s12, 0
      %p111 = por %p109, %p110
      %p112 = scmp.ne.s32.totalorder %s101, %s104
      %p113 = scmp.eq.s32.totalorder %s17, 3
      %p114 = por %p112, %p113
      %p115 = scmp.ne.s32.totalorder %s104, %s105
      %p116 = scmp.eq.s32.totalorder %s17, 0
      %p117 = por %p115, %p116
      %p118 = scmp.ne.s32.totalorder %s104, %s105
      %p119 = scmp.eq.s32.totalorder %s18, 3
      %p120 = por %p118, %p119
      %p122 = scmp.ne.s32.totalorder %s105, %s121
      %p123 = scmp.eq.s32.totalorder %s18, 0
      %p124 = por %p122, %p123
      %s125 = ssub.s32 %s19, %s38
      %s126 = ssub.s32 %s20, %s34
      %s127 = sor.u32 %s125, %s126
      %p128 = scmp.eq.s32.totalorder %s127, 0
      %s130 = sadd.s32 %s129, 1
      %s131 = scalar_select %p128, %s129, %s130
      %p134 = pneg %p128
      %p135 = scmp.eq.s32.totalorder %s12, 3
      %p136 = por %p134, %p135
      %p137 = scmp.ne.s32.totalorder %s129, %s132
      %p138 = scmp.eq.s32.totalorder %s12, 0
      %p139 = por %p137, %p138
      %p140 = scmp.ne.s32.totalorder %s129, %s132
      %p141 = scmp.eq.s32.totalorder %s17, 3
      %p142 = por %p140, %p141
      %p143 = scmp.ne.s32.totalorder %s132, %s133
      %p144 = scmp.eq.s32.totalorder %s17, 0
      %p145 = por %p143, %p144
      %p146 = scmp.ne.s32.totalorder %s132, %s133
      %p147 = scmp.eq.s32.totalorder %s18, 3
      %p148 = por %p146, %p147
      %p150 = scmp.ne.s32.totalorder %s133, %s149
      %p151 = scmp.eq.s32.totalorder %s18, 0
      %p152 = por %p150, %p151
      %p153 = scmp.le.s32.totalorder 1, %s12
      %p154 = scmp.lt.s32.totalorder %s12, 5
      %p155 = pnand %p153, %p154
      %p156 = pneg %p155
      // Predicated region
      $region9: #{tpu_custom_call.1} parent=5 // pred_check
        _
      $region10: #{tpu_custom_call.1} parent=5 // pred_check_branch
        %158 = sbr.rel (%p155) target = $region12
      $region11: #{tpu_custom_call.1} parent=5 // pred_region
        %s159 = ssub.s32 %s12, 1
        // Predicated region
        $region13: #{tpu_custom_call.1} parent=11 // pred_check
          %p160 = pneg %p117
        $region14: #{tpu_custom_call.1} parent=11 // pred_check_branch
          %162 = sbr.rel (%p160) target = $region16
        $region15: #{tpu_custom_call.1} parent=11 // pred_region
          %p163 = scmp.lt.s32.totalorder %s23, 0
          %s164 = scalar_select %p163, %s23, 0
          %s165 = smul.addr %s164, 4
          %s166 = scalar_lea.vmem %s2, %s165
        $region16: #{tpu_custom_call.1} parent=11 // pred_fallthru
          _
      $region12: #{tpu_custom_call.1} parent=5 // pred_fallthru
        _
      %p167 = scmp.lt.s32.totalorder %s12, 4
      // Predicated region
      $region17: #{tpu_custom_call.1} parent=5 // pred_check
        %p168 = pneg %p167
      $region18: #{tpu_custom_call.1} parent=5 // pred_check_branch
        %170 = sbr.rel (%p168) target = $region20
      $region19: #{tpu_custom_call.1} parent=5 // pred_region
        // Predicated region
        $region21: #{tpu_custom_call.1} parent=19 // pred_check
          %p171 = pneg %p53
        $region22: #{tpu_custom_call.1} parent=19 // pred_check_branch
          %173 = sbr.rel (%p171) target = $region24
        $region23: #{tpu_custom_call.1} parent=19 // pred_region
          %s174 = sand.u32 %s43, 1
          %s175 = sand.u32 %s43, 1
          %s176 = smul.addr %s175, 96
          %s177 = scalar_lea.vmem [#allocation4], %s176
          %s178 = smul.u32 4, %s21
          %s179 = ssub.s32 9, %s178
          %p180 = scmp.lt.s32.totalorder %s179, 4
          %s181 = scalar_select %p180, %s179, 4
          %s182 = smul.u32 128, %s181
          %s183 = smul.u32 %s182, 3
          %p184 = scmp.ne.s32.totalorder 0, %s183
          %s185 = smul.addr %s178, 3
          %s186 = smul.addr %s19, 54
          %s187 = sadd.s32 %s185, %s186
          %s188 = smul.addr %s187, 4
          %s189 = scalar_lea.vmem %s0, %s188
          %s190 = smul.u32 %s181, 3
          // Predicated region
          $region25: #{tpu_custom_call.1} parent=23 // pred_check
            %p191 = pneg %p184
          $region26: #{tpu_custom_call.1} parent=23 // pred_check_branch
            %193 = sbr.rel (%p191) target = $region28
          $region27: #{tpu_custom_call.1} parent=23 // pred_region
            // Predicated region
            $region29: #{tpu_custom_call.1} parent=27 // pred_check
              _
            $region30: #{tpu_custom_call.1} parent=27 // pred_check_branch
              %195 = sbr.rel target = $region32
            $region31: #{tpu_custom_call.1} parent=27 // pred_region
              // Predicated region
              $region51: #{tpu_custom_call.1} parent=31 // pred_check
                _
              $region52: #{tpu_custom_call.1} parent=31 // pred_check_branch
                %294 = sbr.rel (0) target = $region54
              $region53: #{tpu_custom_call.1} parent=31 // pred_region
                %s295 = sdiv.u32.pop %s190, 12
                %s296 = srem.u32.pop %s190, 12
                // While loop
                $region55: #{tpu_custom_call.1} parent=53 // loop_pre_header
                  _
                $region56: #{tpu_custom_call.1} parent=53 // loop_header
                  %s298 = sphi 0, %s300
                  %p299 = scmp.ge.s32.totalorder %s298, %s295
                  %s303 = sphi 0, %s308
                  %s304 = sphi %s189, %s311
                  %s305 = sphi %s177, %s312
                $region57: #{tpu_custom_call.1} parent=53 // loop_header_branch
                  %302 = sbr.rel (%p299) target = $region61
                $region58: #{tpu_custom_call.1} parent=53 // loop_body
                  %s306 = sadd.s32 1, %s303
                  %p307 = scmp.ge.s32.totalorder %s306, %s295
                  %s308 = scalar_select %p307, 0, %s306
                  %s309 = smul.u32 %s308, 48
                  %s310 = smul.u32 %s308, 48
                  %s311 = scalar_lea.vmem %s189, %s309
                  %s312 = scalar_lea.vmem %s177, %s310 [#allocation4]
                $region59: #{tpu_custom_call.1} parent=53 // loop_footer
                  %s300 = sadd.s32 %s298, 1
                $region60: #{tpu_custom_call.1} parent=53 // loop_footer_branch
                  %297 = sbr.rel target = $region56
                $region61: #{tpu_custom_call.1} parent=53 // loop_exit
                  _
                %s313 = sdiv.u32.pop %s190, 12
                %s314 = srem.u32.pop %s190, 12
                %s315 = smul.u32 %s313, 12
                %s316 = smul.u32 4, %s315
                %s317 = scalar_lea.vmem %s189, %s316
                %s318 = smul.u32 4, %s315
                %s319 = scalar_lea.vmem %s177, %s318 [#allocation4]
                // While loop
                $region62: #{tpu_custom_call.1} parent=53 // loop_pre_header
                  _
                $region63: #{tpu_custom_call.1} parent=53 // loop_header
                  %s321 = sphi 0, %s323
                  %p322 = scmp.ge.s32.totalorder %s321, %s314
                  %s326 = sphi 0, %s331
                  %s327 = sphi %s317, %s334
                  %s328 = sphi %s319, %s335
                $region64: #{tpu_custom_call.1} parent=53 // loop_header_branch
                  %325 = sbr.rel (%p322) target = $region68
                $region65: #{tpu_custom_call.1} parent=53 // loop_body
                  %s329 = sadd.s32 1, %s326
                  %p330 = scmp.ge.s32.totalorder %s329, %s314
                  %s331 = scalar_select %p330, 0, %s329
                  %s332 = smul.u32 %s331, 4
                  %s333 = smul.u32 %s331, 4
                  %s334 = scalar_lea.vmem %s317, %s332
                  %s335 = scalar_lea.vmem %s319, %s333 [#allocation4]
                $region66: #{tpu_custom_call.1} parent=53 // loop_footer
                  %s323 = sadd.s32 %s321, 1
                $region67: #{tpu_custom_call.1} parent=53 // loop_footer_branch
                  %320 = sbr.rel target = $region63
                $region68: #{tpu_custom_call.1} parent=53 // loop_exit
                  _
                %s337 = ssub.s32 16, 1
                %s338 = sdiv.u32.pop %s190, 12
                %s339 = srem.u32.pop %s190, 12
                // While loop
                $region69: #{tpu_custom_call.1} parent=53 // loop_pre_header
                  _
                $region70: #{tpu_custom_call.1} parent=53 // loop_header
                  %s341 = sphi 0, %s343
                  %p342 = scmp.ge.s32.totalorder %s341, %s338
                  %s346 = sphi 0, %s399
                  %s347 = sphi %s189, %s402
                  %s348 = sphi %s177, %s403
                $region71: #{tpu_custom_call.1} parent=53 // loop_header_branch
                  %345 = sbr.rel (%p342) target = $region75
                $region72: #{tpu_custom_call.1} parent=53 // loop_body
                  %v349 = vld [vmem:[%s347] sm:%s337]
                  %350 = vst [vmem:[%s348] sm:%s337] %v349
                  %v351 = vld [vmem:[%s347 + $0x4] sm:%s337]
                  %352 = vst [vmem:[%s348 + $0x4] sm:%s337] %v351
                  %v353 = vld [vmem:[%s347 + $0x8] sm:%s337]
                  %354 = vst [vmem:[%s348 + $0x8] sm:%s337] %v353
                  %v355 = vld [vmem:[%s347 + $0xc] sm:%s337]
                  %356 = vst [vmem:[%s348 + $0xc] sm:%s337] %v355
                  %v357 = vld [vmem:[%s347 + $0x10] sm:%s337]
                  %358 = vst [vmem:[%s348 + $0x10] sm:%s337] %v357
                  %v359 = vld [vmem:[%s347 + $0x14] sm:%s337]
                  %360 = vst [vmem:[%s348 + $0x14] sm:%s337] %v359
                  %v361 = vld [vmem:[%s347 + $0x18] sm:%s337]
                  %362 = vst [vmem:[%s348 + $0x18] sm:%s337] %v361
                  %v363 = vld [vmem:[%s347 + $0x1c] sm:%s337]
                  %364 = vst [vmem:[%s348 + $0x1c] sm:%s337] %v363
                  %v365 = vld [vmem:[%s347 + $0x20] sm:%s337]
                  %366 = vst [vmem:[%s348 + $0x20] sm:%s337] %v365
                  %v367 = vld [vmem:[%s347 + $0x24] sm:%s337]
                  %368 = vst [vmem:[%s348 + $0x24] sm:%s337] %v367
                  %v369 = vld [vmem:[%s347 + $0x28] sm:%s337]
                  %370 = vst [vmem:[%s348 + $0x28] sm:%s337] %v369
                  %v371 = vld [vmem:[%s347 + $0x2c] sm:%s337]
                  %372 = vst [vmem:[%s348 + $0x2c] sm:%s337] %v371
                  %v373 = vld [vmem:[%s347 + $0x6c] sm:%s337]
                  %374 = vst [vmem:[%s348 + $0x30] sm:%s337] %v373
                  %v375 = vld [vmem:[%s347 + $0x70] sm:%s337]
                  %376 = vst [vmem:[%s348 + $0x34] sm:%s337] %v375
                  %v377 = vld [vmem:[%s347 + $0x74] sm:%s337]
                  %378 = vst [vmem:[%s348 + $0x38] sm:%s337] %v377
                  %v379 = vld [vmem:[%s347 + $0x78] sm:%s337]
                  %380 = vst [vmem:[%s348 + $0x3c] sm:%s337] %v379
                  %v381 = vld [vmem:[%s347 + $0x7c] sm:%s337]
                  %382 = vst [vmem:[%s348 + $0x40] sm:%s337] %v381
                  %v383 = vld [vmem:[%s347 + $0x80] sm:%s337]
                  %384 = vst [vmem:[%s348 + $0x44] sm:%s337] %v383
                  %v385 = vld [vmem:[%s347 + $0x84] sm:%s337]
                  %386 = vst [vmem:[%s348 + $0x48] sm:%s337] %v385
                  %v387 = vld [vmem:[%s347 + $0x88] sm:%s337]
                  %388 = vst [vmem:[%s348 + $0x4c] sm:%s337] %v387
                  %v389 = vld [vmem:[%s347 + $0x8c] sm:%s337]
                  %390 = vst [vmem:[%s348 + $0x50] sm:%s337] %v389
                  %v391 = vld [vmem:[%s347 + $0x90] sm:%s337]
                  %392 = vst [vmem:[%s348 + $0x54] sm:%s337] %v391
                  %v393 = vld [vmem:[%s347 + $0x94] sm:%s337]
                  %394 = vst [vmem:[%s348 + $0x58] sm:%s337] %v393
                  %v395 = vld [vmem:[%s347 + $0x98] sm:%s337]
                  %396 = vst [vmem:[%s348 + $0x5c] sm:%s337] %v395
                  %s397 = sadd.s32 1, %s346
                  %p398 = scmp.ge.s32.totalorder %s397, %s338
                  %s399 = scalar_select %p398, 0, %s397
                  %s400 = smul.u32 %s399, 48
                  %s401 = smul.u32 %s399, 48
                  %s402 = scalar_lea.vmem %s189, %s400
                  %s403 = scalar_lea.vmem %s177, %s401 [#allocation4]
                $region73: #{tpu_custom_call.1} parent=53 // loop_footer
                  %s343 = sadd.s32 %s341, 1
                $region74: #{tpu_custom_call.1} parent=53 // loop_footer_branch
                  %340 = sbr.rel target = $region70
                $region75: #{tpu_custom_call.1} parent=53 // loop_exit
                  _
                %s404 = sdiv.u32.pop %s190, 12
                %s405 = srem.u32.pop %s190, 12
                %s406 = smul.u32 %s404, 12
                %s407 = smul.u32 4, %s406
                %s408 = scalar_lea.vmem %s189, %s407
                %s409 = smul.u32 4, %s406
                %s410 = scalar_lea.vmem %s177, %s409 [#allocation4]
                // While loop
                $region76: #{tpu_custom_call.1} parent=53 // loop_pre_header
                  _
                $region77: #{tpu_custom_call.1} parent=53 // loop_header
                  %s412 = sphi 0, %s414
                  %p413 = scmp.ge.s32.totalorder %s412, %s405
                  %s417 = sphi 0, %s426
                  %s418 = sphi %s408, %s429
                  %s419 = sphi %s410, %s430
                $region78: #{tpu_custom_call.1} parent=53 // loop_header_branch
                  %416 = sbr.rel (%p413) target = $region82
                $region79: #{tpu_custom_call.1} parent=53 // loop_body
                  %v420 = vld [vmem:[%s418] sm:%s337]
                  %421 = vst [vmem:[%s419] sm:%s337] %v420
                  %v422 = vld [vmem:[%s418 + $0x6c] sm:%s337]
                  %423 = vst [vmem:[%s419 + $0x30] sm:%s337] %v422
                  %s424 = sadd.s32 1, %s417
                  %p425 = scmp.ge.s32.totalorder %s424, %s405
                  %s426 = scalar_select %p425, 0, %s424
                  %s427 = smul.u32 %s426, 4
                  %s428 = smul.u32 %s426, 4
                  %s429 = scalar_lea.vmem %s408, %s427
                  %s430 = scalar_lea.vmem %s410, %s428 [#allocation4]
                $region80: #{tpu_custom_call.1} parent=53 // loop_footer
                  %s414 = sadd.s32 %s412, 1
                $region81: #{tpu_custom_call.1} parent=53 // loop_footer_branch
                  %411 = sbr.rel target = $region77
                $region82: #{tpu_custom_call.1} parent=53 // loop_exit
                  _
              $region54: #{tpu_custom_call.1} parent=31 // pred_fallthru
                _
            $region32: #{tpu_custom_call.1} parent=27 // pred_fallthru
              _
            // Predicated region
            $region33: #{tpu_custom_call.1} parent=27 // pred_check
              _
            $region34: #{tpu_custom_call.1} parent=27 // pred_check_branch
              %197 = sbr.rel (0) target = $region36
            $region35: #{tpu_custom_call.1} parent=27 // pred_region
              %s199 = ssub.s32 16, 1
              %s200 = sdiv.u32.pop %s190, 12
              %s201 = srem.u32.pop %s190, 12
              // While loop
              $region37: #{tpu_custom_call.1} parent=35 // loop_pre_header
                _
              $region38: #{tpu_custom_call.1} parent=35 // loop_header
                %s203 = sphi 0, %s205
                %p204 = scmp.ge.s32.totalorder %s203, %s200
                %s208 = sphi 0, %s261
                %s209 = sphi %s189, %s264
                %s210 = sphi %s177, %s265
              $region39: #{tpu_custom_call.1} parent=35 // loop_header_branch
                %207 = sbr.rel (%p204) target = $region43
              $region40: #{tpu_custom_call.1} parent=35 // loop_body
                %v211 = vld [vmem:[%s209] sm:%s199]
                %212 = vst [vmem:[%s210] sm:%s199] %v211
                %v213 = vld [vmem:[%s209 + $0x4] sm:%s199]
                %214 = vst [vmem:[%s210 + $0x4] sm:%s199] %v213
                %v215 = vld [vmem:[%s209 + $0x8] sm:%s199]
                %216 = vst [vmem:[%s210 + $0x8] sm:%s199] %v215
                %v217 = vld [vmem:[%s209 + $0xc] sm:%s199]
                %218 = vst [vmem:[%s210 + $0xc] sm:%s199] %v217
                %v219 = vld [vmem:[%s209 + $0x10] sm:%s199]
                %220 = vst [vmem:[%s210 + $0x10] sm:%s199] %v219
                %v221 = vld [vmem:[%s209 + $0x14] sm:%s199]
                %222 = vst [vmem:[%s210 + $0x14] sm:%s199] %v221
                %v223 = vld [vmem:[%s209 + $0x18] sm:%s199]
                %224 = vst [vmem:[%s210 + $0x18] sm:%s199] %v223
                %v225 = vld [vmem:[%s209 + $0x1c] sm:%s199]
                %226 = vst [vmem:[%s210 + $0x1c] sm:%s199] %v225
                %v227 = vld [vmem:[%s209 + $0x20] sm:%s199]
                %228 = vst [vmem:[%s210 + $0x20] sm:%s199] %v227
                %v229 = vld [vmem:[%s209 + $0x24] sm:%s199]
                %230 = vst [vmem:[%s210 + $0x24] sm:%s199] %v229
                %v231 = vld [vmem:[%s209 + $0x28] sm:%s199]
                %232 = vst [vmem:[%s210 + $0x28] sm:%s199] %v231
                %v233 = vld [vmem:[%s209 + $0x2c] sm:%s199]
                %234 = vst [vmem:[%s210 + $0x2c] sm:%s199] %v233
                %v235 = vld [vmem:[%s209 + $0x6c] sm:%s199]
                %236 = vst [vmem:[%s210 + $0x30] sm:%s199] %v235
                %v237 = vld [vmem:[%s209 + $0x70] sm:%s199]
                %238 = vst [vmem:[%s210 + $0x34] sm:%s199] %v237
                %v239 = vld [vmem:[%s209 + $0x74] sm:%s199]
                %240 = vst [vmem:[%s210 + $0x38] sm:%s199] %v239
                %v241 = vld [vmem:[%s209 + $0x78] sm:%s199]
                %242 = vst [vmem:[%s210 + $0x3c] sm:%s199] %v241
                %v243 = vld [vmem:[%s209 + $0x7c] sm:%s199]
                %244 = vst [vmem:[%s210 + $0x40] sm:%s199] %v243
                %v245 = vld [vmem:[%s209 + $0x80] sm:%s199]
                %246 = vst [vmem:[%s210 + $0x44] sm:%s199] %v245
                %v247 = vld [vmem:[%s209 + $0x84] sm:%s199]
                %248 = vst [vmem:[%s210 + $0x48] sm:%s199] %v247
                %v249 = vld [vmem:[%s209 + $0x88] sm:%s199]
                %250 = vst [vmem:[%s210 + $0x4c] sm:%s199] %v249
                %v251 = vld [vmem:[%s209 + $0x8c] sm:%s199]
                %252 = vst [vmem:[%s210 + $0x50] sm:%s199] %v251
                %v253 = vld [vmem:[%s209 + $0x90] sm:%s199]
                %254 = vst [vmem:[%s210 + $0x54] sm:%s199] %v253
                %v255 = vld [vmem:[%s209 + $0x94] sm:%s199]
                %256 = vst [vmem:[%s210 + $0x58] sm:%s199] %v255
                %v257 = vld [vmem:[%s209 + $0x98] sm:%s199]
                %258 = vst [vmem:[%s210 + $0x5c] sm:%s199] %v257
                %s259 = sadd.s32 1, %s208
                %p260 = scmp.ge.s32.totalorder %s259, %s200
                %s261 = scalar_select %p260, 0, %s259
                %s262 = smul.u32 %s261, 48
                %s263 = smul.u32 %s261, 48
                %s264 = scalar_lea.vmem %s189, %s262
                %s265 = scalar_lea.vmem %s177, %s263 [#allocation4]
              $region41: #{tpu_custom_call.1} parent=35 // loop_footer
                %s205 = sadd.s32 %s203, 1
              $region42: #{tpu_custom_call.1} parent=35 // loop_footer_branch
                %202 = sbr.rel target = $region38
              $region43: #{tpu_custom_call.1} parent=35 // loop_exit
                _
              %s266 = sdiv.u32.pop %s190, 12
              %s267 = srem.u32.pop %s190, 12
              %s268 = smul.u32 %s266, 12
              %s269 = smul.u32 4, %s268
              %s270 = scalar_lea.vmem %s189, %s269
              %s271 = smul.u32 4, %s268
              %s272 = scalar_lea.vmem %s177, %s271 [#allocation4]
              // While loop
              $region44: #{tpu_custom_call.1} parent=35 // loop_pre_header
                _
              $region45: #{tpu_custom_call.1} parent=35 // loop_header
                %s274 = sphi 0, %s276
                %p275 = scmp.ge.s32.totalorder %s274, %s267
                %s279 = sphi 0, %s288
                %s280 = sphi %s270, %s291
                %s281 = sphi %s272, %s292
              $region46: #{tpu_custom_call.1} parent=35 // loop_header_branch
                %278 = sbr.rel (%p275) target = $region50
              $region47: #{tpu_custom_call.1} parent=35 // loop_body
                %v282 = vld [vmem:[%s280] sm:%s199]
                %283 = vst [vmem:[%s281] sm:%s199] %v282
                %v284 = vld [vmem:[%s280 + $0x6c] sm:%s199]
                %285 = vst [vmem:[%s281 + $0x30] sm:%s199] %v284
                %s286 = sadd.s32 1, %s279
                %p287 = scmp.ge.s32.totalorder %s286, %s267
                %s288 = scalar_select %p287, 0, %s286
                %s289 = smul.u32 %s288, 4
                %s290 = smul.u32 %s288, 4
                %s291 = scalar_lea.vmem %s270, %s289
                %s292 = scalar_lea.vmem %s272, %s290 [#allocation4]
              $region48: #{tpu_custom_call.1} parent=35 // loop_footer
                %s276 = sadd.s32 %s274, 1
              $region49: #{tpu_custom_call.1} parent=35 // loop_footer_branch
                %273 = sbr.rel target = $region45
              $region50: #{tpu_custom_call.1} parent=35 // loop_exit
                _
            $region36: #{tpu_custom_call.1} parent=27 // pred_fallthru
              _
          $region28: #{tpu_custom_call.1} parent=23 // pred_fallthru
            _
          %431 = vnop
        $region24: #{tpu_custom_call.1} parent=19 // pred_fallthru
          _
        // Predicated region
        $region83: #{tpu_custom_call.1} parent=19 // pred_check
          %p432 = pneg %p85
        $region84: #{tpu_custom_call.1} parent=19 // pred_check_branch
          %434 = sbr.rel (%p432) target = $region86
        $region85: #{tpu_custom_call.1} parent=19 // pred_region
          %s435 = sand.u32 %s75, 1
          %s436 = sand.u32 %s75, 1
          %s437 = smul.addr %s436, 24
          %s438 = scalar_lea.vmem [#allocation5], %s437
          %s439 = sadd.s32 %s21, 1
          %s440 = smul.u32 %s439, 4
          %s441 = smul.addr %s440, 3
          %s442 = smul.addr %s19, 54
          %s443 = sadd.s32 %s441, %s442
          %s444 = smul.addr %s443, 4
          %s445 = scalar_lea.vmem %s1, %s444
          // Predicated region
          $region87: #{tpu_custom_call.1} parent=85 // pred_check
            _
          $region88: #{tpu_custom_call.1} parent=85 // pred_check_branch
            %447 = sbr.rel (0) target = $region90
          $region89: #{tpu_custom_call.1} parent=85 // pred_region
            // Predicated region
            $region91: #{tpu_custom_call.1} parent=89 // pred_check
              _
            $region92: #{tpu_custom_call.1} parent=89 // pred_check_branch
              %449 = sbr.rel target = $region94
            $region93: #{tpu_custom_call.1} parent=89 // pred_region
              // Predicated region
              $region106: #{tpu_custom_call.1} parent=93 // pred_check
                _
              $region107: #{tpu_custom_call.1} parent=93 // pred_check_branch
                %475 = sbr.rel (0) target = $region109
              $region108: #{tpu_custom_call.1} parent=93 // pred_region
                loop: start=0, step=1, limit=1
                $region110: #{tpu_custom_call.1} parent=108 // loop_pre_header
                  _
                $region111: #{tpu_custom_call.1} parent=108 // loop_header
                  %s477 = sphi 0, %s481
                  %p478 = scmp.ge.s32.totalorder %s477, 1
                  %s482 = sphi %s445, %s445
                  %s483 = sphi %s438, %s438
                $region112: #{tpu_custom_call.1} parent=108 // loop_header_branch
                  %480 = sbr.rel (%p478) target = $region116
                $region113: #{tpu_custom_call.1} parent=108 // loop_body
                  _
                $region114: #{tpu_custom_call.1} parent=108 // loop_footer
                  %s481 = sadd.s32 1, %s477
                $region115: #{tpu_custom_call.1} parent=108 // loop_footer_branch
                  %476 = sbr.rel target = $region111
                $region116: #{tpu_custom_call.1} parent=108 // loop_exit
                  _
                %s485 = ssub.s32 16, 1
                loop: start=0, step=1, limit=1
                $region117: #{tpu_custom_call.1} parent=108 // loop_pre_header
                  _
                $region118: #{tpu_custom_call.1} parent=108 // loop_header
                  %s487 = sphi 0, %s491
                  %p488 = scmp.ge.s32.totalorder %s487, 1
                  %s492 = sphi %s445, %s445
                  %s493 = sphi %s438, %s438
                $region119: #{tpu_custom_call.1} parent=108 // loop_header_branch
                  %490 = sbr.rel (%p488) target = $region123
                $region120: #{tpu_custom_call.1} parent=108 // loop_body
                  %v494 = vld [vmem:[%s492] sm:%s485]
                  %495 = vst [vmem:[%s493] sm:%s485] %v494
                  %v496 = vld [vmem:[%s492 + $0x4] sm:%s485]
                  %497 = vst [vmem:[%s493 + $0x4] sm:%s485] %v496
                  %v498 = vld [vmem:[%s492 + $0x8] sm:%s485]
                  %499 = vst [vmem:[%s493 + $0x8] sm:%s485] %v498
                  %v500 = vld [vmem:[%s492 + $0x6c] sm:%s485]
                  %501 = vst [vmem:[%s493 + $0xc] sm:%s485] %v500
                  %v502 = vld [vmem:[%s492 + $0x70] sm:%s485]
                  %503 = vst [vmem:[%s493 + $0x10] sm:%s485] %v502
                  %v504 = vld [vmem:[%s492 + $0x74] sm:%s485]
                  %505 = vst [vmem:[%s493 + $0x14] sm:%s485] %v504
                $region121: #{tpu_custom_call.1} parent=108 // loop_footer
                  %s491 = sadd.s32 1, %s487
                $region122: #{tpu_custom_call.1} parent=108 // loop_footer_branch
                  %486 = sbr.rel target = $region118
                $region123: #{tpu_custom_call.1} parent=108 // loop_exit
                  _
              $region109: #{tpu_custom_call.1} parent=93 // pred_fallthru
                _
            $region94: #{tpu_custom_call.1} parent=89 // pred_fallthru
              _
            // Predicated region
            $region95: #{tpu_custom_call.1} parent=89 // pred_check
              _
            $region96: #{tpu_custom_call.1} parent=89 // pred_check_branch
              %451 = sbr.rel (0) target = $region98
            $region97: #{tpu_custom_call.1} parent=89 // pred_region
              %s453 = ssub.s32 16, 1
              loop: start=0, step=1, limit=1
              $region99: #{tpu_custom_call.1} parent=97 // loop_pre_header
                _
              $region100: #{tpu_custom_call.1} parent=97 // loop_header
                %s455 = sphi 0, %s459
                %p456 = scmp.ge.s32.totalorder %s455, 1
                %s460 = sphi %s445, %s445
                %s461 = sphi %s438, %s438
              $region101: #{tpu_custom_call.1} parent=97 // loop_header_branch
                %458 = sbr.rel (%p456) target = $region105
              $region102: #{tpu_custom_call.1} parent=97 // loop_body
                %v462 = vld [vmem:[%s460] sm:%s453]
                %463 = vst [vmem:[%s461] sm:%s453] %v462
                %v464 = vld [vmem:[%s460 + $0x4] sm:%s453]
                %465 = vst [vmem:[%s461 + $0x4] sm:%s453] %v464
                %v466 = vld [vmem:[%s460 + $0x8] sm:%s453]
                %467 = vst [vmem:[%s461 + $0x8] sm:%s453] %v466
                %v468 = vld [vmem:[%s460 + $0x6c] sm:%s453]
                %469 = vst [vmem:[%s461 + $0xc] sm:%s453] %v468
                %v470 = vld [vmem:[%s460 + $0x70] sm:%s453]
                %471 = vst [vmem:[%s461 + $0x10] sm:%s453] %v470
                %v472 = vld [vmem:[%s460 + $0x74] sm:%s453]
                %473 = vst [vmem:[%s461 + $0x14] sm:%s453] %v472
              $region103: #{tpu_custom_call.1} parent=97 // loop_footer
                %s459 = sadd.s32 1, %s455
              $region104: #{tpu_custom_call.1} parent=97 // loop_footer_branch
                %454 = sbr.rel target = $region100
              $region105: #{tpu_custom_call.1} parent=97 // loop_exit
                _
            $region98: #{tpu_custom_call.1} parent=89 // pred_fallthru
              _
          $region90: #{tpu_custom_call.1} parent=85 // pred_fallthru
            _
          %506 = vnop
        $region86: #{tpu_custom_call.1} parent=19 // pred_fallthru
          _
      $region20: #{tpu_custom_call.1} parent=5 // pred_fallthru
        _
      %p507 = scmp.le.s32.totalorder 1, %s12
      %p508 = scmp.lt.s32.totalorder %s12, 5
      %p509 = pnand %p507, %p508
      %p510 = pneg %p509
      // Predicated region
      $region124: #{tpu_custom_call.1} parent=5 // pred_check
        _
      $region125: #{tpu_custom_call.1} parent=5 // pred_check_branch
        %512 = sbr.rel (%p509) target = $region127
      $region126: #{tpu_custom_call.1} parent=5 // pred_region
        %s513 = ssub.s32 %s12, 1
        %s514 = sand.u32 %s46, 1
        %s515 = sand.u32 %s46, 1
        %s516 = smul.addr %s515, 96
        %s517 = scalar_lea.vmem [#allocation4], %s516
        // Predicated region
        $region128: #{tpu_custom_call.1} parent=126 // pred_check
          %p518 = pneg %p59
        $region129: #{tpu_custom_call.1} parent=126 // pred_check_branch
          %520 = sbr.rel (%p518) target = $region131
        $region130: #{tpu_custom_call.1} parent=126 // pred_region
          _
        $region131: #{tpu_custom_call.1} parent=126 // pred_fallthru
          _
        %s521 = sand.u32 %s78, 1
        %s522 = sand.u32 %s78, 1
        %s523 = smul.addr %s522, 24
        %s524 = scalar_lea.vmem [#allocation5], %s523
        // Predicated region
        $region132: #{tpu_custom_call.1} parent=126 // pred_check
          %p525 = pneg %p91
        $region133: #{tpu_custom_call.1} parent=126 // pred_check_branch
          %527 = sbr.rel (%p525) target = $region135
        $region134: #{tpu_custom_call.1} parent=126 // pred_region
          _
        $region135: #{tpu_custom_call.1} parent=126 // pred_fallthru
          _
        %s528 = sand.u32 %s46, 1
        %s529 = sand.u32 %s46, 1
        %s530 = smul.addr %s529, 96
        %s531 = scalar_lea.vmem [#allocation4], %s530
        %p532 = pneg %p59
        %p533 = pneg %p56
        %s534 = sand.u32 %s78, 1
        %s535 = sand.u32 %s78, 1
        %s536 = smul.addr %s535, 24
        %s537 = scalar_lea.vmem [#allocation5], %s536
        %p538 = pneg %p91
        %p539 = pneg %p88
        %p540 = scmp.lt.s32.totalorder %s23, 0
        %s541 = scalar_select %p540, %s23, 0
        %s542 = smul.addr %s541, 4
        %s543 = scalar_lea.vmem %s2, %s542
        %p544 = pneg %p117
        %p545 = pneg %p114
        %p546 = pneg %p145
        %p547 = pneg %p142
        %s548 = sand.u32 %s132, 1
        %s549 = scalar_lea.sflag [#allocation7], %s548
        %s550 = sand.u32 %s132, 1
        %s551 = smul.addr %s550, 64
        %s552 = scalar_lea.vmem [#allocation6], %s551
        %s553 = smul.u32 4, %s24
        %s554 = ssub.s32 9, %s553
        %p555 = scmp.lt.s32.totalorder %s554, 4
        %s556 = scalar_select %p555, %s554, 4
        %s557 = smul.u32 128, %s556
        %s558 = smul.u32 %s557, 3
        %s559 = sadd.s32 %s24, 1
        %s560 = smul.u32 %s559, 4
        %p561 = scmp.lt.s32.totalorder %s23, 0
        %s562 = scalar_select %p561, %s23, 0
        %s563 = smul.addr %s562, 4
        %s564 = scalar_lea.vmem %s2, %s563
        %p566 = scmp.eq.s32.totalorder %s24, 0
        // Predicated region
        $region136: #{tpu_custom_call.1} parent=126 // pred_check
          %p567 = pneg %p566
        $region137: #{tpu_custom_call.1} parent=126 // pred_check_branch
          %569 = sbr.rel (%p567) target = $region139
        $region138: #{tpu_custom_call.1} parent=126 // pred_region
          %570 = vst [vmem:[#allocation2] sm:$0x1] 0.0
          %571 = vst [vmem:[#allocation3] sm:$0x1] 0.0
        $region139: #{tpu_custom_call.1} parent=126 // pred_fallthru
          _
        %v572 = vld [vmem:[%s517] sm:$0xf]
        %v573 = vld [vmem:[%s517 + $0x4] sm:$0xf]
        %v574 = vld [vmem:[%s517 + $0x8] sm:$0x1]
        %v575 = vld [vmem:[%s517 + $0xc] sm:$0xf]
        %v576 = vld [vmem:[%s517 + $0x10] sm:$0xf]
        %v577 = vld [vmem:[%s517 + $0x14] sm:$0x1]
        %v578 = vld [vmem:[%s517 + $0x18] sm:$0xf]
        %v579 = vld [vmem:[%s517 + $0x1c] sm:$0xf]
        %v580 = vld [vmem:[%s517 + $0x20] sm:$0x1]
        %v581 = vld [vmem:[%s517 + $0x24] sm:$0xf]
        %v582 = vld [vmem:[%s517 + $0x28] sm:$0xf]
        %v583 = vld [vmem:[%s517 + $0x2c] sm:$0x1]
        %s584 = scalar_lea.vmem %s517, 48 [#allocation4]
        %v585 = vld [vmem:[%s584] sm:$0xf]
        %v586 = vld [vmem:[%s584 + $0x4] sm:$0xf]
        %v587 = vld [vmem:[%s584 + $0x8] sm:$0x1]
        %v588 = vld [vmem:[%s584 + $0xc] sm:$0xf]
        %v589 = vld [vmem:[%s584 + $0x10] sm:$0xf]
        %v590 = vld [vmem:[%s584 + $0x14] sm:$0x1]
        %v591 = vld [vmem:[%s584 + $0x18] sm:$0xf]
        %v592 = vld [vmem:[%s584 + $0x1c] sm:$0xf]
        %v593 = vld [vmem:[%s584 + $0x20] sm:$0x1]
        %v594 = vld [vmem:[%s584 + $0x24] sm:$0xf]
        %v595 = vld [vmem:[%s584 + $0x28] sm:$0xf]
        %v596 = vld [vmem:[%s584 + $0x2c] sm:$0x1]
        %v597 = vld [vmem:[%s524] sm:$0xf]
        %v598 = vld [vmem:[%s524 + $0x4] sm:$0xf]
        %v599 = vld [vmem:[%s524 + $0x8] sm:$0x1]
        %s600 = scalar_lea.vmem %s524, 12 [#allocation5]
        %v601 = vld [vmem:[%s600] sm:$0xf]
        %v602 = vld [vmem:[%s600 + $0x4] sm:$0xf]
        %v603 = vld [vmem:[%s600 + $0x8] sm:$0x1]
        %vm604 = vsmask.f32 3328
        %vm605 = vsmask.f32 7440
        %vm606 = vmor %vm604, %vm605
        %v608 = vshrl.u32 %v573, 16
        %v610 = vrot.slane %v608, 4
        %v611 = vshll.u32 %v573, 16
        %v613 = vrot.slane %v611, 5
        %v614 = vor.u32 %v610, %v613
        %v615 = vrot.slane %v614, 4
        %v617 = vshll.u32 %v574, 16
        %v619 = vrot.slane %v617, 5
        %v620 = vsel %vm606, %v615, %v619
        %v622 = vshrl.u32 %v576, 16
        %v624 = vrot.slane %v622, 4
        %v625 = vshll.u32 %v576, 16
        %v627 = vrot.slane %v625, 5
        %v628 = vor.u32 %v624, %v627
        %v629 = vrot.slane %v628, 4
        %v631 = vshll.u32 %v577, 16
        %v633 = vrot.slane %v631, 5
        %v634 = vsel %vm606, %v629, %v633
        %v636 = vshrl.u32 %v579, 16
        %v638 = vrot.slane %v636, 4
        %v639 = vshll.u32 %v579, 16
        %v641 = vrot.slane %v639, 5
        %v642 = vor.u32 %v638, %v641
        %v643 = vrot.slane %v642, 4
        %v645 = vshll.u32 %v580, 16
        %v647 = vrot.slane %v645, 5
        %v648 = vsel %vm606, %v643, %v647
        %v650 = vshrl.u32 %v582, 16
        %v652 = vrot.slane %v650, 4
        %v653 = vshll.u32 %v582, 16
        %v655 = vrot.slane %v653, 5
        %v656 = vor.u32 %v652, %v655
        %v657 = vrot.slane %v656, 4
        %v659 = vshll.u32 %v583, 16
        %v661 = vrot.slane %v659, 5
        %v662 = vsel %vm606, %v657, %v661
        %v664 = vshrl.u32 %v572, 16
        %v666 = vrot.slane %v664, 4
        %v667 = vshll.u32 %v572, 16
        %v669 = vrot.slane %v667, 5
        %v670 = vor.u32 %v666, %v669
        %v671 = vrot.slane %v670, 4
        %v672 = vsel %vm606, %v671, %v613
        %v674 = vshrl.u32 %v575, 16
        %v676 = vrot.slane %v674, 4
        %v677 = vshll.u32 %v575, 16
        %v679 = vrot.slane %v677, 5
        %v680 = vor.u32 %v676, %v679
        %v681 = vrot.slane %v680, 4
        %v682 = vsel %vm606, %v681, %v627
        %v684 = vshrl.u32 %v578, 16
        %v686 = vrot.slane %v684, 4
        %v687 = vshll.u32 %v578, 16
        %v689 = vrot.slane %v687, 5
        %v690 = vor.u32 %v686, %v689
        %v691 = vrot.slane %v690, 4
        %v692 = vsel %vm606, %v691, %v641
        %v694 = vshrl.u32 %v581, 16
        %v696 = vrot.slane %v694, 4
        %v697 = vshll.u32 %v581, 16
        %v699 = vrot.slane %v697, 5
        %v700 = vor.u32 %v696, %v699
        %v701 = vrot.slane %v700, 4
        %v702 = vsel %vm606, %v701, %v655
        %vm711 = vcmask 1042432
        %vm712 = vcmask 1046532
        %vm713 = vmor %vm711, %vm712
        %v714 = vrot.slane %v573, 5
        %v715 = vrot.slane %v714, 4
        %v716 = vrot.slane %v574, 5
        %v717 = vsel %vm713, %v715, %v716
        %v718 = vrot.slane %v576, 5
        %v719 = vrot.slane %v718, 4
        %v720 = vrot.slane %v577, 5
        %v721 = vsel %vm713, %v719, %v720
        %v722 = vrot.slane %v579, 5
        %v723 = vrot.slane %v722, 4
        %v724 = vrot.slane %v580, 5
        %v725 = vsel %vm713, %v723, %v724
        %v726 = vrot.slane %v582, 5
        %v727 = vrot.slane %v726, 4
        %v728 = vrot.slane %v583, 5
        %v729 = vsel %vm713, %v727, %v728
        %v731 = vshrl.u32 %v586, 16
        %v733 = vrot.slane %v731, 4
        %v734 = vshll.u32 %v586, 16
        %v736 = vrot.slane %v734, 5
        %v737 = vor.u32 %v733, %v736
        %v738 = vrot.slane %v737, 4
        %v740 = vshll.u32 %v587, 16
        %v742 = vrot.slane %v740, 5
        %v743 = vsel %vm606, %v738, %v742
        %v745 = vshrl.u32 %v589, 16
        %v747 = vrot.slane %v745, 4
        %v748 = vshll.u32 %v589, 16
        %v750 = vrot.slane %v748, 5
        %v751 = vor.u32 %v747, %v750
        %v752 = vrot.slane %v751, 4
        %v754 = vshll.u32 %v590, 16
        %v756 = vrot.slane %v754, 5
        %v757 = vsel %vm606, %v752, %v756
        %v759 = vshrl.u32 %v592, 16
        %v761 = vrot.slane %v759, 4
        %v762 = vshll.u32 %v592, 16
        %v764 = vrot.slane %v762, 5
        %v765 = vor.u32 %v761, %v764
        %v766 = vrot.slane %v765, 4
        %v768 = vshll.u32 %v593, 16
        %v770 = vrot.slane %v768, 5
        %v771 = vsel %vm606, %v766, %v770
        %v773 = vshrl.u32 %v595, 16
        %v775 = vrot.slane %v773, 4
        %v776 = vshll.u32 %v595, 16
        %v778 = vrot.slane %v776, 5
        %v779 = vor.u32 %v775, %v778
        %v780 = vrot.slane %v779, 4
        %v782 = vshll.u32 %v596, 16
        %v784 = vrot.slane %v782, 5
        %v785 = vsel %vm606, %v780, %v784
        %v787 = vshrl.u32 %v585, 16
        %v789 = vrot.slane %v787, 4
        %v790 = vshll.u32 %v585, 16
        %v792 = vrot.slane %v790, 5
        %v793 = vor.u32 %v789, %v792
        %v794 = vrot.slane %v793, 4
        %v795 = vsel %vm606, %v794, %v736
        %v797 = vshrl.u32 %v588, 16
        %v799 = vrot.slane %v797, 4
        %v800 = vshll.u32 %v588, 16
        %v802 = vrot.slane %v800, 5
        %v803 = vor.u32 %v799, %v802
        %v804 = vrot.slane %v803, 4
        %v805 = vsel %vm606, %v804, %v750
        %v807 = vshrl.u32 %v591, 16
        %v809 = vrot.slane %v807, 4
        %v810 = vshll.u32 %v591, 16
        %v812 = vrot.slane %v810, 5
        %v813 = vor.u32 %v809, %v812
        %v814 = vrot.slane %v813, 4
        %v815 = vsel %vm606, %v814, %v764
        %v817 = vshrl.u32 %v594, 16
        %v819 = vrot.slane %v817, 4
        %v820 = vshll.u32 %v594, 16
        %v822 = vrot.slane %v820, 5
        %v823 = vor.u32 %v819, %v822
        %v824 = vrot.slane %v823, 4
        %v825 = vsel %vm606, %v824, %v778
        %v834 = vrot.slane %v586, 5
        %v835 = vrot.slane %v834, 4
        %v836 = vrot.slane %v587, 5
        %v837 = vsel %vm713, %v835, %v836
        %v838 = vrot.slane %v589, 5
        %v839 = vrot.slane %v838, 4
        %v840 = vrot.slane %v590, 5
        %v841 = vsel %vm713, %v839, %v840
        %v842 = vrot.slane %v592, 5
        %v843 = vrot.slane %v842, 4
        %v844 = vrot.slane %v593, 5
        %v845 = vsel %vm713, %v843, %v844
        %v846 = vrot.slane %v595, 5
        %v847 = vrot.slane %v846, 4
        %v848 = vrot.slane %v596, 5
        %v849 = vsel %vm713, %v847, %v848
        %v851 = vshrl.u32 %v598, 16
        %v853 = vrot.slane %v851, 4
        %v854 = vshll.u32 %v598, 16
        %v856 = vrot.slane %v854, 5
        %v857 = vor.u32 %v853, %v856
        %v858 = vrot.slane %v857, 4
        %v860 = vshll.u32 %v599, 16
        %v862 = vrot.slane %v860, 5
        %v863 = vsel %vm606, %v858, %v862
        %v865 = vshrl.u32 %v597, 16
        %v867 = vrot.slane %v865, 4
        %v868 = vshll.u32 %v597, 16
        %v870 = vrot.slane %v868, 5
        %v871 = vor.u32 %v867, %v870
        %v872 = vrot.slane %v871, 4
        %v873 = vsel %vm606, %v872, %v856
        %v876 = vrot.slane %v598, 5
        %v877 = vrot.slane %v876, 4
        %v878 = vrot.slane %v599, 5
        %v879 = vsel %vm713, %v877, %v878
        %v881 = vshrl.u32 %v602, 16
        %v883 = vrot.slane %v881, 4
        %v884 = vshll.u32 %v602, 16
        %v886 = vrot.slane %v884, 5
        %v887 = vor.u32 %v883, %v886
        %v888 = vrot.slane %v887, 4
        %v890 = vshll.u32 %v603, 16
        %v892 = vrot.slane %v890, 5
        %v893 = vsel %vm606, %v888, %v892
        %v895 = vshrl.u32 %v601, 16
        %v897 = vrot.slane %v895, 4
        %v898 = vshll.u32 %v601, 16
        %v900 = vrot.slane %v898, 5
        %v901 = vor.u32 %v897, %v900
        %v902 = vrot.slane %v901, 4
        %v903 = vsel %vm606, %v902, %v886
        %v906 = vrot.slane %v602, 5
        %v907 = vrot.slane %v906, 4
        %v908 = vrot.slane %v603, 5
        %v909 = vsel %vm713, %v907, %v908
        %v914 = vunpack.c.l.b16 %v572
        %v915 = vunpack.c.l.b16 %v575
        %v916 = vunpack.c.l.b16 %v578
        %v917 = vunpack.c.l.b16 %v581
        %v918 = vpack.c.b16 %v915, %v914
        %v919 = vpack.c.b16 %v917, %v916
        %v920 = vunpack.c.l.b16 %v620
        %v921 = vunpack.c.l.b16 %v634
        %v922 = vunpack.c.l.b16 %v648
        %v923 = vunpack.c.l.b16 %v662
        %v924 = vpack.c.b16 %v921, %v920
        %v925 = vpack.c.b16 %v923, %v922
        %926 = vrot.lane.b32.xlu0 %v924, 4
        %v927 = vpop.permute.xlu0 %926
        %928 = vrot.lane.b32.xlu0 %v925, 4
        %v929 = vpop.permute.xlu0 %928
        %v930 = vunpack.c.l.b16 %v672
        %v931 = vunpack.c.l.b16 %v682
        %v932 = vunpack.c.l.b16 %v692
        %v933 = vunpack.c.l.b16 %v702
        %v934 = vpack.c.b16 %v931, %v930
        %v935 = vpack.c.b16 %v933, %v932
        %936 = vrot.lane.b32.xlu0 %v934, 8
        %v937 = vpop.permute.xlu0 %936
        %938 = vrot.lane.b32.xlu0 %v935, 8
        %v939 = vpop.permute.xlu0 %938
        %v940 = vunpack.c.l.b16 %v717
        %v941 = vunpack.c.l.b16 %v721
        %v942 = vunpack.c.l.b16 %v725
        %v943 = vunpack.c.l.b16 %v729
        %v944 = vpack.c.b16 %v941, %v940
        %v945 = vpack.c.b16 %v943, %v942
        %946 = vrot.lane.b32.xlu0 %v944, 12
        %v947 = vpop.permute.xlu0 %946
        %948 = vrot.lane.b32.xlu0 %v945, 12
        %v949 = vpop.permute.xlu0 %948
        %v954 = vunpack.c.l.b16 %v585
        %v955 = vunpack.c.l.b16 %v588
        %v956 = vunpack.c.l.b16 %v591
        %v957 = vunpack.c.l.b16 %v594
        %v958 = vpack.c.b16 %v955, %v954
        %v959 = vpack.c.b16 %v957, %v956
        %960 = vrot.lane.b32.xlu0 %v958, 16
        %v961 = vpop.permute.xlu0 %960
        %962 = vrot.lane.b32.xlu0 %v959, 16
        %v963 = vpop.permute.xlu0 %962
        %v964 = vunpack.c.l.b16 %v743
        %v965 = vunpack.c.l.b16 %v757
        %v966 = vunpack.c.l.b16 %v771
        %v967 = vunpack.c.l.b16 %v785
        %v968 = vpack.c.b16 %v965, %v964
        %v969 = vpack.c.b16 %v967, %v966
        %970 = vrot.lane.b32.xlu0 %v968, 20
        %v971 = vpop.permute.xlu0 %970
        %972 = vrot.lane.b32.xlu0 %v969, 20
        %v973 = vpop.permute.xlu0 %972
        %v974 = vunpack.c.l.b16 %v795
        %v975 = vunpack.c.l.b16 %v805
        %v976 = vunpack.c.l.b16 %v815
        %v977 = vunpack.c.l.b16 %v825
        %v978 = vpack.c.b16 %v975, %v974
        %v979 = vpack.c.b16 %v977, %v976
        %980 = vrot.lane.b32.xlu0 %v978, 24
        %v981 = vpop.permute.xlu0 %980
        %982 = vrot.lane.b32.xlu0 %v979, 24
        %v983 = vpop.permute.xlu0 %982
        %v984 = vunpack.c.l.b16 %v837
        %v985 = vunpack.c.l.b16 %v841
        %v986 = vunpack.c.l.b16 %v845
        %v987 = vunpack.c.l.b16 %v849
        %v988 = vpack.c.b16 %v985, %v984
        %v989 = vpack.c.b16 %v987, %v986
        %990 = vrot.lane.b32.xlu0 %v988, 28
        %v991 = vpop.permute.xlu0 %990
        %992 = vrot.lane.b32.xlu0 %v989, 28
        %v993 = vpop.permute.xlu0 %992
        %v995 = vunpack.c.l.b16 %v597
        %v996 = vpack.c.b16 %v916, %v915
        %v997 = vpack.c.b16 %v995, %v917
        %998 = vrot.lane.b32.xlu0 %v996, 32
        %v999 = vpop.permute.xlu0 %998
        %1000 = vrot.lane.b32.xlu0 %v997, 32
        %v1001 = vpop.permute.xlu0 %1000
        %v1002 = vunpack.c.l.b16 %v863
        %v1003 = vpack.c.b16 %v922, %v921
        %v1004 = vpack.c.b16 %v1002, %v923
        %1005 = vrot.lane.b32.xlu0 %v1003, 36
        %v1006 = vpop.permute.xlu0 %1005
        %1007 = vrot.lane.b32.xlu0 %v1004, 36
        %v1008 = vpop.permute.xlu0 %1007
        %v1009 = vunpack.c.l.b16 %v873
        %v1010 = vpack.c.b16 %v932, %v931
        %v1011 = vpack.c.b16 %v1009, %v933
        %1012 = vrot.lane.b32.xlu0 %v1010, 40
        %v1013 = vpop.permute.xlu0 %1012
        %1014 = vrot.lane.b32.xlu0 %v1011, 40
        %v1015 = vpop.permute.xlu0 %1014
        %v1016 = vunpack.c.l.b16 %v879
        %v1017 = vpack.c.b16 %v942, %v941
        %v1018 = vpack.c.b16 %v1016, %v943
        %1019 = vrot.lane.b32.xlu0 %v1017, 44
        %v1020 = vpop.permute.xlu0 %1019
        %1021 = vrot.lane.b32.xlu0 %v1018, 44
        %v1022 = vpop.permute.xlu0 %1021
        %v1024 = vunpack.c.l.b16 %v601
        %v1025 = vpack.c.b16 %v956, %v955
        %v1026 = vpack.c.b16 %v1024, %v957
        %1027 = vrot.lane.b32.xlu0 %v1025, 48
        %v1028 = vpop.permute.xlu0 %1027
        %1029 = vrot.lane.b32.xlu0 %v1026, 48
        %v1030 = vpop.permute.xlu0 %1029
        %v1031 = vunpack.c.l.b16 %v893
        %v1032 = vpack.c.b16 %v966, %v965
        %v1033 = vpack.c.b16 %v1031, %v967
        %1034 = vrot.lane.b32.xlu0 %v1032, 52
        %v1035 = vpop.permute.xlu0 %1034
        %1036 = vrot.lane.b32.xlu0 %v1033, 52
        %v1037 = vpop.permute.xlu0 %1036
        %v1038 = vunpack.c.l.b16 %v903
        %v1039 = vpack.c.b16 %v976, %v975
        %v1040 = vpack.c.b16 %v1038, %v977
        %1041 = vrot.lane.b32.xlu0 %v1039, 56
        %v1042 = vpop.permute.xlu0 %1041
        %1043 = vrot.lane.b32.xlu0 %v1040, 56
        %v1044 = vpop.permute.xlu0 %1043
        %v1045 = vunpack.c.l.b16 %v909
        %v1046 = vpack.c.b16 %v986, %v985
        %v1047 = vpack.c.b16 %v1045, %v987
        %1048 = vrot.lane.b32.xlu0 %v1046, 60
        %v1049 = vpop.permute.xlu0 %1048
        %1050 = vrot.lane.b32.xlu0 %v1047, 60
        %v1051 = vpop.permute.xlu0 %1050
        %vm1052 = vcmask 31744
        %v1055 = vsel %vm1052, %v918, %v927
        %v1058 = vsel %vm1052, %v919, %v929
        %vm1059 = vcmask 64512
        %v1061 = vsel %vm1059, %v1055, %v937
        %v1063 = vsel %vm1059, %v1058, %v939
        %vm1064 = vcmask 97280
        %v1066 = vsel %vm1064, %v1061, %v947
        %v1068 = vsel %vm1064, %v1063, %v949
        %vm1069 = vcmask 130048
        %v1071 = vsel %vm1069, %v1066, %v961
        %v1073 = vsel %vm1069, %v1068, %v963
        %vm1074 = vcmask 162816
        %v1076 = vsel %vm1074, %v1071, %v971
        %v1078 = vsel %vm1074, %v1073, %v973
        %vm1079 = vcmask 195584
        %v1081 = vsel %vm1079, %v1076, %v981
        %v1083 = vsel %vm1079, %v1078, %v983
        %vm1084 = vcmask 228352
        %v1086 = vsel %vm1084, %v1081, %v991
        %v1088 = vsel %vm1084, %v1083, %v993
        %vm1089 = vcmask 261120
        %v1091 = vsel %vm1089, %v1086, %v999
        %v1093 = vsel %vm1089, %v1088, %v1001
        %vm1094 = vcmask 293888
        %v1096 = vsel %vm1094, %v1091, %v1006
        %v1098 = vsel %vm1094, %v1093, %v1008
        %vm1099 = vcmask 326656
        %v1101 = vsel %vm1099, %v1096, %v1013
        %v1103 = vsel %vm1099, %v1098, %v1015
        %vm1104 = vcmask 359424
        %v1106 = vsel %vm1104, %v1101, %v1020
        %v1108 = vsel %vm1104, %v1103, %v1022
        %vm1109 = vcmask 392192
        %v1111 = vsel %vm1109, %v1106, %v1028
        %v1113 = vsel %vm1109, %v1108, %v1030
        %vm1114 = vcmask 424960
        %v1116 = vsel %vm1114, %v1111, %v1035
        %v1118 = vsel %vm1114, %v1113, %v1037
        %vm1119 = vcmask 457728
        %v1121 = vsel %vm1119, %v1116, %v1042
        %v1123 = vsel %vm1119, %v1118, %v1044
        %vm1124 = vcmask 490496
        %v1126 = vsel %vm1124, %v1121, %v1049
        %v1128 = vsel %vm1124, %v1123, %v1051
        %v1129 = vld [vmem:[%s564] sm:$0xf]
        %v1130 = vld [vmem:[%s564 + $0x4] sm:$0xf]
        %v1131 = vld [vmem:[%s564 + $0x8] sm:$0xf]
        %v1132 = vld [vmem:[%s564 + $0xc] sm:$0xf]
        %v1133 = vld [vmem:[%s564 + $0x10] sm:$0xf]
        %v1134 = vld [vmem:[%s564 + $0x14] sm:$0xf]
        %v1135 = vld [vmem:[%s564 + $0x18] sm:$0xf]
        %v1136 = vld [vmem:[%s564 + $0x1c] sm:$0xf]
        %v1145 = vunpack.c.l.b16 %v1129
        %v1146 = vunpack.c.l.b16 %v1130
        %v1147 = vunpack.c.l.b16 %v1131
        %v1148 = vunpack.c.l.b16 %v1132
        %v1149 = vunpack.c.l.b16 %v1133
        %v1150 = vunpack.c.l.b16 %v1134
        %v1151 = vunpack.c.l.b16 %v1135
        %v1152 = vunpack.c.l.b16 %v1136
        %v1153 = vpack.c.b16 %v1146, %v1145
        %v1154 = vpack.c.b16 %v1148, %v1147
        %v1155 = vpack.c.b16 %v1150, %v1149
        %v1156 = vpack.c.b16 %v1152, %v1151
        %vm1161 = vcmask 523264
        %v1162 = vsel %vm1161, %v1126, 0
        %v1164 = vsel %vm1161, %v1128, 0
        %1166 = vmatprep.subr.bf16.mxu0 0
        %1167 = vmatpush1.bf16.msra.mxu0 0
        %1168 = vmatprep.subr.bf16.mxu0 0
        %1169 = vmatpush1.bf16.msra.mxu0 0
        %1170 = vmatprep.subr.bf16.mxu0 0
        %1171 = vmatpush1.bf16.msra.mxu0 0
        %1172 = vmatprep.subr.bf16.mxu0 0
        %1173 = vmatpush1.bf16.msra.mxu0 0
        %1174 = vmatprep.subr.bf16.mxu0 0
        %1175 = vmatpush1.bf16.msra.mxu0 %v1156
        %1176 = vmatprep.subr.bf16.mxu0 0
        %1177 = vmatpush1.bf16.msra.mxu0 %v1155
        %1178 = vmatprep.subr.bf16.mxu0 0
        %1179 = vmatpush1.bf16.msra.mxu0 %v1154
        %1180 = vmatprep.subr.bf16.mxu0 0
        %1181 = vmatpush1.bf16.msra.mxu0 %v1153
        %1182 = vmatprep.subr.bf16.mxu0 0
        %1183 = vmatpush2.bf16.msra.mxu0 0
        %1184 = vmatprep.subr.bf16.mxu0 0
        %1185 = vmatpush2.bf16.msra.mxu0 0
        %1186 = vmatprep.subr.bf16.mxu0 0
        %1187 = vmatpush2.bf16.msra.mxu0 0
        %1188 = vmatprep.subr.bf16.mxu0 0
        %1189 = vmatpush2.bf16.msra.mxu0 0
        %1190 = vmatprep.subr.bf16.mxu0 0
        %1191 = vmatpush2.bf16.msra.mxu0 0
        %1192 = vmatprep.subr.bf16.mxu0 0
        %1193 = vmatpush2.bf16.msra.mxu0 0
        %1194 = vmatprep.subr.bf16.mxu0 0
        %1195 = vmatpush2.bf16.msra.mxu0 0
        %1196 = vmatprep.subr.bf16.mxu0 0
        %1197 = vmatpush2.bf16.msra.mxu0 0
        %1198 = vmatprep.mubr.bf16.mxu0 0
        %1199 = vmatmul.mubr.bf16.gmra.mxu0 %v1162
        %v1200 = vpop.f32.mrf.mxu0
        %v1201 = vadd.f32 0.0, %v1200
        %v1202 = vpop.f32.mrf.mxu0
        %v1203 = vpop.f32.mrf.mxu0
        %v1204 = vadd.f32 0.0, %v1203
        %v1205 = vpop.f32.mrf.mxu0
        %1206 = vmatprep.mubr.bf16.mxu0 0
        %1207 = vmatmul.mubr.bf16.gmra.mxu0 %v1164
        %v1208 = vpop.f32.mrf.mxu0
        %v1209 = vadd.f32 0.0, %v1208
        %v1210 = vpop.f32.mrf.mxu0
        %v1211 = vpop.f32.mrf.mxu0
        %v1212 = vadd.f32 0.0, %v1211
        %v1213 = vpop.f32.mrf.mxu0
        %1214 = vdwg.mxu0
        %s1215 = smul.u32 %s24, 32
        %s1216 = scalar_lea.vmem %s552, %s1215 [#allocation6]
        %1217 = vst [vmem:[%s1216] sm:$0xff] %v1201
        %1218 = vst [vmem:[%s1216 + $0x8] sm:$0xff] %v1204
        %1219 = vst [vmem:[%s1216 + $0x10] sm:$0xff] %v1209
        %1220 = vst [vmem:[%s1216 + $0x18] sm:$0xff] %v1212
        %v1221 = vld [vmem:[#allocation2] sm:$0x1]
        %v1222 = vadd.f32 %v1201, %v1204
        %v1223 = vadd.f32 %v1222, %v1209
        %v1224 = vadd.f32 %v1223, %v1212
        %v1225 = vrot.slane %v1224, 4
        %v1226 = vadd.f32 %v1224, %v1225
        %v1227 = vrot.slane %v1226, 2
        %v1228 = vadd.f32 %v1226, %v1227
        %v1229 = vrot.slane %v1228, 1
        %v1230 = vadd.f32 %v1228, %v1229
        %v1231 = vadd.f32 %v1221, %v1230
        %1232 = vst [vmem:[#allocation2] sm:$0x1] %v1231
        %v1233 = vld [vmem:[#allocation3] sm:$0x1]
        %v1234 = vmul.f32 %v1201, %v1201
        %v1235 = vmul.f32 %v1204, %v1204
        %v1236 = vmul.f32 %v1209, %v1209
        %v1237 = vmul.f32 %v1212, %v1212
        %v1238 = vadd.f32 %v1234, %v1235
        %v1239 = vadd.f32 %v1238, %v1236
        %v1240 = vadd.f32 %v1239, %v1237
        %v1241 = vrot.slane %v1240, 4
        %v1242 = vadd.f32 %v1240, %v1241
        %v1243 = vrot.slane %v1242, 2
        %v1244 = vadd.f32 %v1242, %v1243
        %v1245 = vrot.slane %v1244, 1
        %v1246 = vadd.f32 %v1244, %v1245
        %v1247 = vadd.f32 %v1233, %v1246
        %1248 = vst [vmem:[#allocation3] sm:$0x1] %v1247
        %p1249 = scmp.eq.s32.totalorder %s24, 1
        // Predicated region
        $region140: #{tpu_custom_call.1} parent=126 // pred_check
          %p1250 = pneg %p1249
        $region141: #{tpu_custom_call.1} parent=126 // pred_check_branch
          %1252 = sbr.rel (%p1250) target = $region143
        $region142: #{tpu_custom_call.1} parent=126 // pred_region
          %v1253 = vld [vmem:[#allocation2] sm:$0x1]
          %v1254 = vmul.f32 %v1253, 0.015625
          %v1255 = vld [vmem:[#allocation3] sm:$0x1]
          %v1256 = vmul.f32 %v1255, 0.015625
          %v1257 = vmul.f32 %v1254, %v1254
          %v1258 = vsub.f32 %v1256, %v1257
          %v1259 = vadd.f32 %v1258, 1e-05
          %v1260 = vrsqrt.pop %v1259
          %v1261 = vsub.f32 0.0, %v1254
          %v1262 = vmul.f32 %v1261, %v1260
          loop: start=0, step=1, limit=2
          $region144: #{tpu_custom_call.1} parent=142 // loop_pre_header
            _
          $region145: #{tpu_custom_call.1} parent=142 // loop_header
            %s1264 = sphi 0, %s1268
            %p1265 = scmp.ge.s32.totalorder %s1264, 2
          $region146: #{tpu_custom_call.1} parent=142 // loop_header_branch
            %1267 = sbr.rel (%p1265) target = $region150
          $region147: #{tpu_custom_call.1} parent=142 // loop_body
            %s1269 = smul.u32 %s1264, 32
            %s1270 = scalar_lea.vmem %s552, %s1269 [#allocation6]
            %v1271 = vld [vmem:[%s1270] sm:$0xff]
            %v1272 = vld [vmem:[%s1270 + $0x8] sm:$0xff]
            %v1273 = vld [vmem:[%s1270 + $0x10] sm:$0xff]
            %v1274 = vld [vmem:[%s1270 + $0x18] sm:$0xff]
            %v1276 = vlaneseq
            %v1277 = vshrl.u32 %v1276, 7
            %v1278 = vsub.s32 0, %v1277
            %v1279 = vrot.slane %v1260, %v1278
            %v1281 = vmul.f32 %v1271, %v1279
            %v1282 = vmul.f32 %v1272, %v1279
            %v1283 = vmul.f32 %v1273, %v1279
            %v1284 = vmul.f32 %v1274, %v1279
            %v1286 = vlaneseq
            %v1287 = vshrl.u32 %v1286, 7
            %v1288 = vsub.s32 0, %v1287
            %v1289 = vrot.slane %v1262, %v1288
            %v1291 = vadd.f32 %v1281, %v1289
            %v1292 = vadd.f32 %v1282, %v1289
            %v1293 = vadd.f32 %v1283, %v1289
            %v1294 = vadd.f32 %v1284, %v1289
            %vm1295 = vcmp.ge.f32.partialorder %v1291, 0.0
            %vm1296 = vcmp.ge.f32.partialorder %v1292, 0.0
            %vm1297 = vcmp.ge.f32.partialorder %v1293, 0.0
            %vm1298 = vcmp.ge.f32.partialorder %v1294, 0.0
            %v1299 = vmul.f32 %v1291, 0.2
            %v1300 = vmul.f32 %v1292, 0.2
            %v1301 = vmul.f32 %v1293, 0.2
            %v1302 = vmul.f32 %v1294, 0.2
            %v1303 = vsel %vm1295, %v1291, %v1299
            %v1304 = vsel %vm1296, %v1292, %v1300
            %v1305 = vsel %vm1297, %v1293, %v1301
            %v1306 = vsel %vm1298, %v1294, %v1302
            %1307 = vst [vmem:[%s1270] sm:$0xff] %v1303
            %1308 = vst [vmem:[%s1270 + $0x8] sm:$0xff] %v1304
            %1309 = vst [vmem:[%s1270 + $0x10] sm:$0xff] %v1305
            %1310 = vst [vmem:[%s1270 + $0x18] sm:$0xff] %v1306
          $region148: #{tpu_custom_call.1} parent=142 // loop_footer
            %s1268 = sadd.s32 1, %s1264
          $region149: #{tpu_custom_call.1} parent=142 // loop_footer_branch
            %1263 = sbr.rel target = $region145
          $region150: #{tpu_custom_call.1} parent=142 // loop_exit
            _
        $region143: #{tpu_custom_call.1} parent=126 // pred_fallthru
          _
        %s1311 = sand.u32 %s132, 1
        %s1312 = scalar_lea.sflag [#allocation7], %s1311
        %s1313 = sand.u32 %s132, 1
        %s1314 = smul.addr %s1313, 64
        %s1315 = scalar_lea.vmem [#allocation6], %s1314
        // Predicated region
        $region151: #{tpu_custom_call.1} parent=126 // pred_check
          %p1316 = pneg %p142
        $region152: #{tpu_custom_call.1} parent=126 // pred_check_branch
          %1318 = sbr.rel (%p1316) target = $region154
        $region153: #{tpu_custom_call.1} parent=126 // pred_region
          %s1320 = ssub.s32 1024, 1024
          %1321 = vsyncadd %s1312, %s1320
          %s1322 = smul.addr %s22, 8
          %s1323 = sadd.s32 %s23, %s1322
          %s1324 = smul.addr %s1323, 128
          %s1325 = scalar_lea.hbm %s3, %s1324
          %s1326 = sshll.u32 %s1315, 4
          %s1327 = int_to_ptr.vmem [resolvable:$true] %s1326
          %1332 = dma.vmem_to_hbm [thread:$0]  %s1327, 1024, %s1325, %s1312, 128, 128, 8
        $region154: #{tpu_custom_call.1} parent=126 // pred_fallthru
          _
      $region127: #{tpu_custom_call.1} parent=5 // pred_fallthru
        _
      %p1333 = scmp.le.s32.totalorder 2, %s12
      // Predicated region
      $region155: #{tpu_custom_call.1} parent=5 // pred_check
        %p1334 = pneg %p1333
      $region156: #{tpu_custom_call.1} parent=5 // pred_check_branch
        %1336 = sbr.rel (%p1334) target = $region158
      $region157: #{tpu_custom_call.1} parent=5 // pred_region
        %s1337 = ssub.s32 %s12, 2
        // Predicated region
        $region159: #{tpu_custom_call.1} parent=157 // pred_check
          %p1338 = pneg %p148
        $region160: #{tpu_custom_call.1} parent=157 // pred_check_branch
          %1340 = sbr.rel (%p1338) target = $region162
        $region161: #{tpu_custom_call.1} parent=157 // pred_region
          %s1341 = sand.u32 %s133, 1
          %s1342 = scalar_lea.sflag [#allocation7], %s1341
          %s1343 = sand.u32 %s133, 1
          %s1344 = smul.addr %s1343, 64
          %s1345 = scalar_lea.vmem [#allocation6], %s1344
          %1346 = dma.done %s1342, 1024
        $region162: #{tpu_custom_call.1} parent=157 // pred_fallthru
          _
      $region158: #{tpu_custom_call.1} parent=5 // pred_fallthru
        _
    $region6: #{tpu_custom_call.1} parent=1 // loop_footer
      %s16 = sadd.s32 1, %s12
    $region7: #{tpu_custom_call.1} parent=1 // loop_footer_branch
      %11 = sbr.rel target = $region3
    $region8: #{tpu_custom_call.1} parent=1 // loop_exit
      _
    %1347 = vsyncpa [#allocation7], 1
    %s1348 = scalar_lea.sflag [#allocation7], 1
    %1349 = vsyncpa %s1348, 1

</llo_original>
